<compile_context>
chip_gen: v7x
topology: tpu7x:2x2x1
jax: 0.10.0
libtpu: 0.0.40
codegen_flags: <defaults>
</compile_context>

<pallas_src>
import functools

import jax
import jax.numpy as jnp
from jax.experimental import pallas as pl
from jax.experimental.pallas import tpu as pltpu

_HIDDEN = 128


def _round_up(x, m):
    return (x + m - 1) // m * m


def _elu(x):
    # ELU with alpha=1.0 (PyTorch default). exp is guarded so the discarded branch
    # cannot overflow (also makes garbage rows of a partial batch block harmless).
    return jnp.where(x > 0, x, jnp.exp(jnp.minimum(x, 0.0)) - 1.0)


def encoder_decoder_kernel(
    x_ref, noise_ref,
    we_t_ref, be_ref,          # encoder:  we_t (1, D_in) f32, be (1, 1) f32
    w1_ref, b1_ref,            # fc1:      w1 (1, 128),   b1 (1, 128)
    w2_ref, b2_ref,            # fc2:      w2 (128, 128), b2 (1, 128)
    w4_ref, b4_ref,            # fc4:      w4 (128, 128), b4 (1, 128)
    w3_ref, b3_ref,            # fc3:      w3 (128, D_out), b3 (1, D_out)
    bott_ref, recon_ref,       # outputs:  (TB, 1) f32, (TB, D_out)
):
    # ---- LinearEncoder: bottleneck_dim == 1 -> broadcast multiply + lane reduce ----
    # (avoids a degenerate N=1 MXU matmul). Accumulation stays f32 even for bf16 x.
    x = x_ref[...].astype(jnp.float32)                                         # (TB, D_in)
    bott = jnp.sum(x * we_t_ref[...], axis=-1, keepdims=True) + be_ref[...]    # (TB, 1)

    # Minimal-traffic bottleneck store: 4 B/row (was a 128-lane broadcast slab before).
    bott_ref[...] = bott.astype(bott_ref.dtype)

    # ---- add Gaussian noise (generated host-side, already scaled) ----
    z = bott + noise_ref[...].astype(jnp.float32)                              # (TB, 1)

    # ---- StochasticDecoder ----
    mm_dtype = w2_ref.dtype    # bf16 feed when decoder weights are bf16; f32 accumulation always
    # fc1: K == 1 -> broadcast multiply on the VPU (in f32; safe on v5e)
    h = _elu(z * w1_ref[...].astype(jnp.float32) + b1_ref[...])                # (TB, 128)
    # fc2 / fc4: 128x128 MXU matmuls
    h = _elu(jnp.dot(h.astype(mm_dtype), w2_ref[...],
                     preferred_element_type=jnp.float32) + b2_ref[...])
    h = _elu(jnp.dot(h.astype(mm_dtype), w4_ref[...],
                     preferred_element_type=jnp.float32) + b4_ref[...])
    # fc3: (TB, 128) x (128, D_out)
    recon_ref[...] = (jnp.dot(h.astype(mm_dtype), w3_ref[...],
                              preferred_element_type=jnp.float32)
                      + b3_ref[...]).astype(recon_ref.dtype)


@functools.partial(jax.jit, static_argnames=("block_b", "recon_dtype"))
def encoder_decoder(x, noise, params, *, block_b=256, recon_dtype=jnp.float32):
    """block_b guidance: 256 default; 512 on v5e/v6e at real shapes (d_in~8252, raised VMEM
    cap); on v7x use 256 for f32 in/out and 512 only with bf16 x / bf16 recon."""
    B, d_in = x.shape
    bott_dim = params["we_t"].shape[0]
    d_out = params["w3"].shape[1]
    assert bott_dim == 1, "kernel assumes bottleneck_dim == 1 (as in the PyTorch module)"

    # Batch tile: multiple of 8 sublanes; keep >= 2 grid steps when the batch allows it so
    # both v7x TensorCores get tiles under dimension_semantics=("parallel",).
    block_b = max(8, _round_up(block_b, 8))
    tb = min(block_b, _round_up(B, 8))
    if B > 16 and pl.cdiv(B, tb) < 2:
        tb = _round_up(pl.cdiv(B, 2), 8)
    grid = (pl.cdiv(B, tb),)   # partial last block handled by Pallas (no wrapper pad copy)

    weight_args = (
        params["we_t"], params["be"],
        params["w1"], params["b1"],
        params["w2"], params["b2"],
        params["w4"], params["b4"],
        params["w3"], params["b3"],
    )
    args = (x, noise) + weight_args

    # x / noise / outputs tiled over the batch grid; weights & biases use a constant
    # index_map so they stay VMEM-resident across grid steps (no re-DMA per step).
    def batch_spec(cols):
        return pl.BlockSpec((tb, cols), lambda i: (i, 0))

    def resident_spec(arr):
        return pl.BlockSpec(arr.shape, lambda i: (0, 0))

    in_specs = ([batch_spec(d_in), batch_spec(bott_dim)]
                + [resident_spec(w) for w in weight_args])
    out_specs = (batch_spec(bott_dim), batch_spec(d_out))
    out_shape = (
        jax.ShapeDtypeStruct((B, bott_dim), jnp.float32),
        jax.ShapeDtypeStruct((B, d_out), recon_dtype),
    )

    # Advisory cost estimate for XLA's scheduler.
    flops = 2 * B * (d_in * bott_dim + bott_dim * _HIDDEN
                     + 2 * _HIDDEN * _HIDDEN + _HIDDEN * d_out)
    recon_itemsize = jnp.dtype(recon_dtype).itemsize
    bytes_accessed = int(sum(a.size * a.dtype.itemsize for a in args)
                         + B * (4 * bott_dim + recon_itemsize * d_out))
    cost = pl.CostEstimate(flops=int(flops),
                           transcendentals=int(3 * B * _HIDDEN),
                           bytes_accessed=bytes_accessed)

    # VMEM budget: double-buffered batch tiles (in + out), resident weights (counted 2x,
    # conservative for the pipelined allocation), plus f32 temporaries (encoder product,
    # fc3 accumulator, hidden activations) and a little headroom.
    in_tile = tb * (d_in * x.dtype.itemsize + bott_dim * noise.dtype.itemsize)
    out_tile = tb * (bott_dim * 4 + d_out * recon_itemsize)
    weight_bytes = sum(a.size * a.dtype.itemsize for a in weight_args)
    temp_bytes = tb * (d_in + d_out + 2 * _HIDDEN) * 4
    vmem_need = 2 * (in_tile + out_tile) + 2 * weight_bytes + temp_bytes + (2 << 20)

    # Per-generation cap: ~7/8 of physical VMEM, never above ~100 MiB.
    #   v7x (64 MiB)  -> ~56 MiB cap (leaves headroom for compiler scratch/semaphores)
    #   v5e/v6e (128) -> 100 MiB cap (lets TB=512 f32 tiles fit at d_in~8252)
    try:
        phys_vmem = getattr(pltpu.get_tpu_info(), "vmem_capacity_bytes", 64 << 20)
    except Exception:  # pragma: no cover - conservative fallback
        phys_vmem = 64 << 20
    cap = min(int(phys_vmem) * 7 // 8, 100 << 20)
    vmem_limit = int(min(max(vmem_need, 32 << 20), cap))

    bott, recon = pl.pallas_call(
        encoder_decoder_kernel,
        grid=grid,
        in_specs=in_specs,
        out_specs=out_specs,
        out_shape=out_shape,
        compiler_params=pltpu.CompilerParams(
            dimension_semantics=("parallel",),   # shard batch tiles across TCs (v7x)
            vmem_limit_bytes=vmem_limit,
        ),
        cost_estimate=cost,
    )(*args)

    return bott, recon


def as_bf16_inputs(x, params, *, cast_x=True):
    """HBM-bandwidth optimization for ALL generations (v5e/v6e/v7x; v5e benefits most):
    feed x and the decoder MXU weights (w2/w4/w3) as bf16 — only the MXU sees bf16, all
    accumulation stays f32 in-kernel. Encoder weights/biases and w1 stay f32 (tiny, and the
    encoder reduce / fc1 run on the VPU). Pass cast_x=False to keep the *returned* bottleneck
    at full f32 precision (only the decoder-weight load shrinks)."""
    p = dict(params)
    for k in ("w2", "w4", "w3"):
        p[k] = params[k].astype(jnp.bfloat16)
    return (x.astype(jnp.bfloat16) if cast_x else x), p


def init_params(key, input_dim, bottleneck_dim, output_dim, hidden=_HIDDEN):
    """Synthetic init mirroring the module's shapes; weights ~ U(-0.005, 0.005) as in the
    PyTorch init.uniform_ calls. Weights stored pre-transposed to (in, out)."""
    ks = jax.random.split(key, 10)
    u = lambda k, shape, lo, hi: jax.random.uniform(k, shape, jnp.float32, lo, hi)
    return {
        "we_t": u(ks[0], (bottleneck_dim, input_dim), -0.005, 0.005),
        "be":   u(ks[1], (1, bottleneck_dim), -0.01, 0.01),
        "w1":   u(ks[2], (bottleneck_dim, hidden), -0.005, 0.005),
        "b1":   u(ks[3], (1, hidden), -0.01, 0.01),
        "w2":   u(ks[4], (hidden, hidden), -0.005, 0.005),
        "b2":   u(ks[5], (1, hidden), -0.01, 0.01),
        "w4":   u(ks[6], (hidden, hidden), -0.005, 0.005),
        "b4":   u(ks[7], (1, hidden), -0.01, 0.01),
        "w3":   u(ks[8], (hidden, output_dim), -0.005, 0.005),
        "b3":   u(ks[9], (1, output_dim), -0.01, 0.01),
        # NOTE: self.log_var exists as a parameter but is unused in forward(); omitted.
    }


def reference(x, noise, params):
    """Pure-JAX f32 reference of the same forward pass."""
    bott = x @ params["we_t"].T + params["be"]
    z = bott + noise
    elu = lambda v: jnp.where(v > 0, v, jnp.exp(jnp.minimum(v, 0.0)) - 1.0)
    h = elu(z @ params["w1"] + params["b1"])
    h = elu(h @ params["w2"] + params["b2"])
    h = elu(h @ params["w4"] + params["b4"])
    return bott, h @ params["w3"] + params["b3"]


if __name__ == "__main__":
    # Small shapes consistent with the module (real input_dim=8252 scaled down);
    # B=200 deliberately not a multiple of the batch tile to exercise the partial
    # last grid block, and large enough that the grid has >= 2 steps.
    B, INPUT_DIM, BOTTLENECK_DIM, OUTPUT_DIM = 200, 384, 1, 384
    NOISE_VARIANCE = 0.005

    key = jax.random.PRNGKey(0)
    k_x, k_n, k_p = jax.random.split(key, 3)

    x = jax.random.normal(k_x, (B, INPUT_DIM), jnp.float32)
    # PyTorch forward(): noise = randn_like(bottleneck) * noise_variance (literal multiply).
    noise = jax.random.normal(k_n, (B, BOTTLENECK_DIM), jnp.float32) * NOISE_VARIANCE
    params = init_params(k_p, INPUT_DIM, BOTTLENECK_DIM, OUTPUT_DIM)

    ref_bott, ref_recon = reference(x, noise, params)

    # f32 path (tight check).
    bott, recon = jax.block_until_ready(encoder_decoder(x, noise, params))
    assert bott.shape == (B, BOTTLENECK_DIM)
    assert recon.shape == (B, OUTPUT_DIM)
    assert jnp.allclose(bott, ref_bott, atol=5e-5, rtol=1e-3)
    assert jnp.allclose(recon, ref_recon, atol=5e-5, rtol=1e-3)

    # bf16-fed path (recommended on all generations) + bf16 recon writeback; f32 accumulation.
    xb, pb = as_bf16_inputs(x, params)
    bott16, recon16 = jax.block_until_ready(
        encoder_decoder(xb, noise, pb, recon_dtype=jnp.bfloat16))
    assert recon16.dtype == jnp.bfloat16
    assert jnp.allclose(bott16, ref_bott, atol=5e-3, rtol=5e-2)
    assert jnp.allclose(recon16.astype(jnp.float32), ref_recon, atol=5e-3, rtol=5e-2)

    print("KERNEL_OK")
</pallas_src>

<mosaic_0001>
module attributes {stable_mosaic.version = 11 : i64} {
  func.func @encoder_decoder_kernel(%arg0: i32, %arg1: memref<104x384xf32, #tpu.memory_space<vmem>>, %arg2: memref<104x1xf32, #tpu.memory_space<vmem>>, %arg3: memref<1x384xf32, #tpu.memory_space<vmem>>, %arg4: memref<1x1xf32, #tpu.memory_space<vmem>>, %arg5: memref<1x128xf32, #tpu.memory_space<vmem>>, %arg6: memref<1x128xf32, #tpu.memory_space<vmem>>, %arg7: memref<128x128xf32, #tpu.memory_space<vmem>>, %arg8: memref<1x128xf32, #tpu.memory_space<vmem>>, %arg9: memref<128x128xf32, #tpu.memory_space<vmem>>, %arg10: memref<1x128xf32, #tpu.memory_space<vmem>>, %arg11: memref<128x384xf32, #tpu.memory_space<vmem>>, %arg12: memref<1x384xf32, #tpu.memory_space<vmem>>, %arg13: memref<104x1xf32, #tpu.memory_space<vmem>>, %arg14: memref<104x384xf32, #tpu.memory_space<vmem>>) attributes {dimension_semantics = [#tpu.dimension_semantics<parallel>], iteration_bounds = array<i64: 2>, scalar_prefetch = 0 : i64, scratch_operands = 0 : i64, tpu.core_type = #tpu.core_type<tc>, window_params = [{transform_indices = @transform_0, window_bounds = array<i64: 104, 384>}, {transform_indices = @transform_1, window_bounds = array<i64: 104, 1>}, {pipeline_mode = #tpu.pipeline_mode<synchronous>, transform_indices = @transform_2, window_bounds = array<i64: 1, 384>}, {pipeline_mode = #tpu.pipeline_mode<synchronous>, transform_indices = @transform_3, window_bounds = array<i64: 1, 1>}, {pipeline_mode = #tpu.pipeline_mode<synchronous>, transform_indices = @transform_4, window_bounds = array<i64: 1, 128>}, {pipeline_mode = #tpu.pipeline_mode<synchronous>, transform_indices = @transform_5, window_bounds = array<i64: 1, 128>}, {pipeline_mode = #tpu.pipeline_mode<synchronous>, transform_indices = @transform_6, window_bounds = array<i64: 128, 128>}, {pipeline_mode = #tpu.pipeline_mode<synchronous>, transform_indices = @transform_7, window_bounds = array<i64: 1, 128>}, {pipeline_mode = #tpu.pipeline_mode<synchronous>, transform_indices = @transform_8, window_bounds = array<i64: 128, 128>}, {pipeline_mode = #tpu.pipeline_mode<synchronous>, transform_indices = @transform_9, window_bounds = array<i64: 1, 128>}, {pipeline_mode = #tpu.pipeline_mode<synchronous>, transform_indices = @transform_10, window_bounds = array<i64: 128, 384>}, {pipeline_mode = #tpu.pipeline_mode<synchronous>, transform_indices = @transform_11, window_bounds = array<i64: 1, 384>}, {transform_indices = @transform_12, window_bounds = array<i64: 104, 1>}, {transform_indices = @transform_13, window_bounds = array<i64: 104, 384>}]} {
    %c0 = arith.constant 0 : index
    %c0_0 = arith.constant 0 : index
    %0 = vector.load %arg1[%c0, %c0_0] : memref<104x384xf32, #tpu.memory_space<vmem>>, vector<104x384xf32>
    %c0_1 = arith.constant 0 : index
    %c0_2 = arith.constant 0 : index
    %1 = vector.load %arg3[%c0_1, %c0_2] : memref<1x384xf32, #tpu.memory_space<vmem>>, vector<1x384xf32>
    %2 = vector.broadcast %1 : vector<1x384xf32> to vector<104x384xf32>
    %3 = arith.mulf %0, %2 : vector<104x384xf32>
    %cst = arith.constant dense<0.000000e+00> : vector<104xf32>
    %4 = vector.multi_reduction <add>, %3, %cst [1] : vector<104x384xf32> to vector<104xf32>
    %5 = vector.shape_cast %4 : vector<104xf32> to vector<104x1xf32>
    %c0_3 = arith.constant 0 : index
    %c0_4 = arith.constant 0 : index
    %6 = vector.load %arg4[%c0_3, %c0_4] : memref<1x1xf32, #tpu.memory_space<vmem>>, vector<1x1xf32>
    %7 = vector.broadcast %6 : vector<1x1xf32> to vector<104x1xf32>
    %8 = arith.addf %5, %7 : vector<104x1xf32>
    %c0_5 = arith.constant 0 : index
    %c0_6 = arith.constant 0 : index
    %9 = vector.load %arg13[%c0_5, %c0_6] : memref<104x1xf32, #tpu.memory_space<vmem>>, vector<104x1xf32>
    tpu.vector_store %arg13[%c0_5, %c0_6], %8 {strides = array<i32>} : memref<104x1xf32, #tpu.memory_space<vmem>>, vector<104x1xf32>,
    %c0_7 = arith.constant 0 : index
    %c0_8 = arith.constant 0 : index
    %10 = vector.load %arg2[%c0_7, %c0_8] : memref<104x1xf32, #tpu.memory_space<vmem>>, vector<104x1xf32>
    %11 = arith.addf %8, %10 : vector<104x1xf32>
    %c0_9 = arith.constant 0 : index
    %c0_10 = arith.constant 0 : index
    %12 = vector.load %arg5[%c0_9, %c0_10] : memref<1x128xf32, #tpu.memory_space<vmem>>, vector<1x128xf32>
    %13 = vector.broadcast %11 : vector<104x1xf32> to vector<104x128xf32>
    %14 = vector.broadcast %12 : vector<1x128xf32> to vector<104x128xf32>
    %15 = arith.mulf %13, %14 : vector<104x128xf32>
    %c0_11 = arith.constant 0 : index
    %c0_12 = arith.constant 0 : index
    %16 = vector.load %arg6[%c0_11, %c0_12] : memref<1x128xf32, #tpu.memory_space<vmem>>, vector<1x128xf32>
    %17 = vector.broadcast %16 : vector<1x128xf32> to vector<104x128xf32>
    %18 = arith.addf %15, %17 : vector<104x128xf32>
    %cst_13 = arith.constant 0.000000e+00 : f32
    %19 = vector.broadcast %cst_13 : f32 to vector<104x128xf32>
    %20 = arith.cmpf ogt, %18, %19 : vector<104x128xf32>
    %cst_14 = arith.constant 0.000000e+00 : f32
    %21 = vector.broadcast %cst_14 : f32 to vector<104x128xf32>
    %22 = arith.minimumf %18, %21 : vector<104x128xf32>
    %23 = math.exp %22 : vector<104x128xf32>
    %cst_15 = arith.constant 1.000000e+00 : f32
    %24 = vector.broadcast %cst_15 : f32 to vector<104x128xf32>
    %25 = arith.subf %23, %24 : vector<104x128xf32>
    %26 = arith.select %20, %18, %25 : vector<104x128xi1>, vector<104x128xf32>
    %c0_16 = arith.constant 0 : index
    %c0_17 = arith.constant 0 : index
    %27 = vector.load %arg7[%c0_16, %c0_17] : memref<128x128xf32, #tpu.memory_space<vmem>>, vector<128x128xf32>
    %cst_18 = arith.constant dense<0.000000e+00> : vector<104x128xf32>
    %28 = tpu.matmul %26, %27, %cst_18 {dimension_numbers = #tpu.dot_dimension_numbers<[1], [0], [0], [1], [0, 0, 1, 1], [], []>} : vector<104x128xf32>, vector<128x128xf32>, vector<104x128xf32> -> vector<104x128xf32>
    %c0_19 = arith.constant 0 : index
    %c0_20 = arith.constant 0 : index
    %29 = vector.load %arg8[%c0_19, %c0_20] : memref<1x128xf32, #tpu.memory_space<vmem>>, vector<1x128xf32>
    %30 = vector.broadcast %29 : vector<1x128xf32> to vector<104x128xf32>
    %31 = arith.addf %28, %30 : vector<104x128xf32>
    %cst_21 = arith.constant 0.000000e+00 : f32
    %32 = vector.broadcast %cst_21 : f32 to vector<104x128xf32>
    %33 = arith.cmpf ogt, %31, %32 : vector<104x128xf32>
    %cst_22 = arith.constant 0.000000e+00 : f32
    %34 = vector.broadcast %cst_22 : f32 to vector<104x128xf32>
    %35 = arith.minimumf %31, %34 : vector<104x128xf32>
    %36 = math.exp %35 : vector<104x128xf32>
    %cst_23 = arith.constant 1.000000e+00 : f32
    %37 = vector.broadcast %cst_23 : f32 to vector<104x128xf32>
    %38 = arith.subf %36, %37 : vector<104x128xf32>
    %39 = arith.select %33, %31, %38 : vector<104x128xi1>, vector<104x128xf32>
    %c0_24 = arith.constant 0 : index
    %c0_25 = arith.constant 0 : index
    %40 = vector.load %arg9[%c0_24, %c0_25] : memref<128x128xf32, #tpu.memory_space<vmem>>, vector<128x128xf32>
    %cst_26 = arith.constant dense<0.000000e+00> : vector<104x128xf32>
    %41 = tpu.matmul %39, %40, %cst_26 {dimension_numbers = #tpu.dot_dimension_numbers<[1], [0], [0], [1], [0, 0, 1, 1], [], []>} : vector<104x128xf32>, vector<128x128xf32>, vector<104x128xf32> -> vector<104x128xf32>
    %c0_27 = arith.constant 0 : index
    %c0_28 = arith.constant 0 : index
    %42 = vector.load %arg10[%c0_27, %c0_28] : memref<1x128xf32, #tpu.memory_space<vmem>>, vector<1x128xf32>
    %43 = vector.broadcast %42 : vector<1x128xf32> to vector<104x128xf32>
    %44 = arith.addf %41, %43 : vector<104x128xf32>
    %cst_29 = arith.constant 0.000000e+00 : f32
    %45 = vector.broadcast %cst_29 : f32 to vector<104x128xf32>
    %46 = arith.cmpf ogt, %44, %45 : vector<104x128xf32>
    %cst_30 = arith.constant 0.000000e+00 : f32
    %47 = vector.broadcast %cst_30 : f32 to vector<104x128xf32>
    %48 = arith.minimumf %44, %47 : vector<104x128xf32>
    %49 = math.exp %48 : vector<104x128xf32>
    %cst_31 = arith.constant 1.000000e+00 : f32
    %50 = vector.broadcast %cst_31 : f32 to vector<104x128xf32>
    %51 = arith.subf %49, %50 : vector<104x128xf32>
    %52 = arith.select %46, %44, %51 : vector<104x128xi1>, vector<104x128xf32>
    %c0_32 = arith.constant 0 : index
    %c0_33 = arith.constant 0 : index
    %53 = vector.load %arg11[%c0_32, %c0_33] : memref<128x384xf32, #tpu.memory_space<vmem>>, vector<128x384xf32>
    %cst_34 = arith.constant dense<0.000000e+00> : vector<104x384xf32>
    %54 = tpu.matmul %52, %53, %cst_34 {dimension_numbers = #tpu.dot_dimension_numbers<[1], [0], [0], [1], [0, 0, 1, 1], [], []>} : vector<104x128xf32>, vector<128x384xf32>, vector<104x384xf32> -> vector<104x384xf32>
    %c0_35 = arith.constant 0 : index
    %c0_36 = arith.constant 0 : index
    %55 = vector.load %arg12[%c0_35, %c0_36] : memref<1x384xf32, #tpu.memory_space<vmem>>, vector<1x384xf32>
    %56 = vector.broadcast %55 : vector<1x384xf32> to vector<104x384xf32>
    %57 = arith.addf %54, %56 : vector<104x384xf32>
    %c0_37 = arith.constant 0 : index
    %c0_38 = arith.constant 0 : index
    %58 = vector.load %arg14[%c0_37, %c0_38] : memref<104x384xf32, #tpu.memory_space<vmem>>, vector<104x384xf32>
    tpu.vector_store %arg14[%c0_37, %c0_38], %57 {strides = array<i32>} : memref<104x384xf32, #tpu.memory_space<vmem>>, vector<104x384xf32>,
    return
  }
  func.func @transform_0(%arg0: i32) -> (i32, i32) {
    %c0_i32 = arith.constant 0 : i32
    %c0_i32_0 = arith.constant 0 : i32
    return %arg0, %c0_i32 : i32, i32
  }
  func.func @transform_1(%arg0: i32) -> (i32, i32) {
    %c0_i32 = arith.constant 0 : i32
    %c0_i32_0 = arith.constant 0 : i32
    return %arg0, %c0_i32 : i32, i32
  }
  func.func @transform_2(%arg0: i32) -> (i32, i32) {
    %c0_i32 = arith.constant 0 : i32
    %c0_i32_0 = arith.constant 0 : i32
    %c0_i32_1 = arith.constant 0 : i32
    return %c0_i32, %c0_i32_0 : i32, i32
  }
  func.func @transform_3(%arg0: i32) -> (i32, i32) {
    %c0_i32 = arith.constant 0 : i32
    %c0_i32_0 = arith.constant 0 : i32
    %c0_i32_1 = arith.constant 0 : i32
    return %c0_i32, %c0_i32_0 : i32, i32
  }
  func.func @transform_4(%arg0: i32) -> (i32, i32) {
    %c0_i32 = arith.constant 0 : i32
    %c0_i32_0 = arith.constant 0 : i32
    %c0_i32_1 = arith.constant 0 : i32
    return %c0_i32, %c0_i32_0 : i32, i32
  }
  func.func @transform_5(%arg0: i32) -> (i32, i32) {
    %c0_i32 = arith.constant 0 : i32
    %c0_i32_0 = arith.constant 0 : i32
    %c0_i32_1 = arith.constant 0 : i32
    return %c0_i32, %c0_i32_0 : i32, i32
  }
  func.func @transform_6(%arg0: i32) -> (i32, i32) {
    %c0_i32 = arith.constant 0 : i32
    %c0_i32_0 = arith.constant 0 : i32
    %c0_i32_1 = arith.constant 0 : i32
    return %c0_i32, %c0_i32_0 : i32, i32
  }
  func.func @transform_7(%arg0: i32) -> (i32, i32) {
    %c0_i32 = arith.constant 0 : i32
    %c0_i32_0 = arith.constant 0 : i32
    %c0_i32_1 = arith.constant 0 : i32
    return %c0_i32, %c0_i32_0 : i32, i32
  }
  func.func @transform_8(%arg0: i32) -> (i32, i32) {
    %c0_i32 = arith.constant 0 : i32
    %c0_i32_0 = arith.constant 0 : i32
    %c0_i32_1 = arith.constant 0 : i32
    return %c0_i32, %c0_i32_0 : i32, i32
  }
  func.func @transform_9(%arg0: i32) -> (i32, i32) {
    %c0_i32 = arith.constant 0 : i32
    %c0_i32_0 = arith.constant 0 : i32
    %c0_i32_1 = arith.constant 0 : i32
    return %c0_i32, %c0_i32_0 : i32, i32
  }
  func.func @transform_10(%arg0: i32) -> (i32, i32) {
    %c0_i32 = arith.constant 0 : i32
    %c0_i32_0 = arith.constant 0 : i32
    %c0_i32_1 = arith.constant 0 : i32
    return %c0_i32, %c0_i32_0 : i32, i32
  }
  func.func @transform_11(%arg0: i32) -> (i32, i32) {
    %c0_i32 = arith.constant 0 : i32
    %c0_i32_0 = arith.constant 0 : i32
    %c0_i32_1 = arith.constant 0 : i32
    return %c0_i32, %c0_i32_0 : i32, i32
  }
  func.func @transform_12(%arg0: i32) -> (i32, i32) {
    %c0_i32 = arith.constant 0 : i32
    %c0_i32_0 = arith.constant 0 : i32
    return %arg0, %c0_i32 : i32, i32
  }
  func.func @transform_13(%arg0: i32) -> (i32, i32) {
    %c0_i32 = arith.constant 0 : i32
    %c0_i32_0 = arith.constant 0 : i32
    return %arg0, %c0_i32 : i32, i32
  }
}

</mosaic_0001>

<llo_original>
// kernel: encoder_decoder.1
$region0: #{encoder_decoder.1}
  #allocation0 [shape = 'u32[]', space=smem, size = 0x4, offset = 0x4, fixed_abs, tag = 'smem constant byte address 0x4 - core index']
  #allocation1 [shape = 'u32[144,128]{1,0:T(1,128)}', space=vmem, size = 0x12000, scoped, tag = 'internal scratch']
  #allocation2 [shape = 'f32[1,1]{1,0:T(1,128)S(1)}', space=vmem, size = 0x200, scoped, tag = 'scoped memory for encoder_decoder.1']
  %s0 = inlined_call_operand.hbm [shape: f32[200,384], index: 0, kind: input, shape index: {}]
  %s1 = inlined_call_operand.vmem [shape: f32[200,1], index: 1, kind: input, shape index: {}]
  %s2 = inlined_call_operand.vmem [shape: f32[1,384], index: 2, kind: input, shape index: {}]
  %s3 = inlined_call_operand.<no memory space> [shape: f32[1,1], index: 3, kind: input, shape index: {}]
  %s4 = inlined_call_operand.vmem [shape: f32[1,128], index: 4, kind: input, shape index: {}]
  %s5 = inlined_call_operand.vmem [shape: f32[1,128], index: 5, kind: input, shape index: {}]
  %s6 = inlined_call_operand.vmem [shape: f32[128,128], index: 6, kind: input, shape index: {}]
  %s7 = inlined_call_operand.vmem [shape: f32[1,128], index: 7, kind: input, shape index: {}]
  %s8 = inlined_call_operand.hbm [shape: f32[128,128], index: 8, kind: input, shape index: {}]
  %s9 = inlined_call_operand.vmem [shape: f32[1,128], index: 9, kind: input, shape index: {}]
  %s10 = inlined_call_operand.hbm [shape: f32[128,384], index: 10, kind: input, shape index: {}]
  %s11 = inlined_call_operand.vmem [shape: f32[1,384], index: 11, kind: input, shape index: {}]
  %s12 = inlined_call_operand.vmem [shape: f32[200,1], index: 12, kind: output, shape index: {0}]
  %s13 = inlined_call_operand.hbm [shape: f32[200,384], index: 13, kind: output, shape index: {1}]
  %14 = xla_tuple %s12, %s13
  %s15 = sld [smem:[#allocation0]]
  $region149: #{encoder_decoder.1} parent=0
    _
  %s17 = ssub.s32 1, %s15
  %s18 = scalar_select 0, %s17, %s15
  %v19 = vstv %s3
  %20 = vst [vmem:[#allocation2] sm:$0x1] %v19
  $region1: #{encoder_decoder.1} parent=0
    #allocation3 [shape = 'u8[319488]{0}', space=vmem, size = 0x4e000, scoped, tag = 'input window, operand 0']
    #allocation4 [shape = 's32[2]{0}', space=sflag, size = 0x8, scoped, tag = 'scoped memory for encoder_decoder.1']
    #allocation5 [shape = 's32[2]{0}', space=sflag, size = 0x8, scoped, tag = 'scoped memory for encoder_decoder.1']
    #allocation6 [shape = 'u8[65536]{0}', space=vmem, size = 0x10000, scoped, tag = 'input window, operand 8, single buffered']
    #allocation7 [shape = 's32[1]{0}', space=sflag, size = 0x4, scoped, tag = 'scoped memory for encoder_decoder.1']
    #allocation8 [shape = 'u8[196608]{0}', space=vmem, size = 0x30000, scoped, tag = 'input window, operand 10, single buffered']
    #allocation9 [shape = 'u8[106496]{0}', space=vmem, size = 0x1a000, scoped, tag = 'output window, operand 0']
    #allocation10 [shape = 'u8[319488]{0}', space=vmem, size = 0x4e000, scoped, tag = 'output window, operand 1']
    %21 = vsyncpa [#allocation4], 0
    %s22 = scalar_lea.sflag [#allocation4], 1
    %23 = vsyncpa %s22, 0
    %24 = vsyncpa [#allocation7], 0
    %25 = vsyncpa [#allocation5], 0
    %s26 = scalar_lea.sflag [#allocation5], 1
    %27 = vsyncpa %s26, 0
    loop: start=0, step=1, limit=4
    $region2: #{encoder_decoder.1} parent=1 // loop_pre_header
      _
    $region3: #{encoder_decoder.1} parent=1 // loop_header
      %s29 = sphi 0, %s33
      %p30 = scmp.ge.s32.totalorder %s29, 4
      %s39 = sphi 0, %s41
      %s42 = sphi 0, %s39
      %s43 = sphi 0, %s42
      %s59 = sphi 0, %s43
      %s65 = sphi 0, %s67
      %s68 = sphi 0, %s65
      %s69 = sphi 0, %s68
      %s85 = sphi 0, %s69
      %s89 = sphi 0, %s89
      %s91 = sphi 0, %s89
      %s92 = sphi 0, %s91
      %s106 = sphi 0, %s92
      %s110 = sphi 0, %s110
      %s112 = sphi 0, %s110
      %s113 = sphi 0, %s112
      %s127 = sphi 0, %s113
      %s131 = sphi 0, %s131
      %s133 = sphi 0, %s131
      %s134 = sphi 0, %s133
      %s148 = sphi 0, %s134
      %s152 = sphi 0, %s152
      %s154 = sphi 0, %s152
      %s155 = sphi 0, %s154
      %s169 = sphi 0, %s155
      %s173 = sphi 0, %s173
      %s175 = sphi 0, %s173
      %s176 = sphi 0, %s175
      %s190 = sphi 0, %s176
      %s194 = sphi 0, %s194
      %s196 = sphi 0, %s194
      %s197 = sphi 0, %s196
      %s211 = sphi 0, %s197
      %s215 = sphi 0, %s215
      %s217 = sphi 0, %s215
      %s218 = sphi 0, %s217
      %s232 = sphi 0, %s218
      %s236 = sphi 0, %s236
      %s238 = sphi 0, %s236
      %s239 = sphi 0, %s238
      %s253 = sphi 0, %s239
      %s257 = sphi 0, %s257
      %s259 = sphi 0, %s257
      %s260 = sphi 0, %s259
      %s274 = sphi 0, %s260
      %s278 = sphi 0, %s278
      %s280 = sphi 0, %s278
      %s281 = sphi 0, %s280
      %s295 = sphi 0, %s281
      %s301 = sphi 0, %s303
      %s304 = sphi 0, %s301
      %s305 = sphi 0, %s304
      %s321 = sphi 0, %s305
      %s327 = sphi 0, %s329
      %s330 = sphi 0, %s327
      %s331 = sphi 0, %s330
      %s347 = sphi 0, %s331
    $region4: #{encoder_decoder.1} parent=1 // loop_header_branch
      %32 = sbr.rel (%p30) target = $region8
    $region5: #{encoder_decoder.1} parent=1 // loop_body
      %s34 = ssub.s32 %s29, 1
      %s35 = ssub.s32 %s29, 2
      %s36 = sadd.s32 %s29, 1
      %s37 = ssub.s32 %s29, %s36
      %p38 = scmp.eq.s32.totalorder %s37, 0
      %s40 = sadd.s32 %s39, 1
      %s41 = scalar_select %p38, %s39, %s40
      %p44 = pneg %p38
      %p45 = scmp.eq.s32.totalorder %s29, 1
      %p46 = por %p44, %p45
      %p47 = scmp.ne.s32.totalorder %s39, %s42
      %p48 = scmp.eq.s32.totalorder %s29, 0
      %p49 = por %p47, %p48
      %p50 = scmp.ne.s32.totalorder %s39, %s42
      %p51 = scmp.eq.s32.totalorder %s34, 1
      %p52 = por %p50, %p51
      %p53 = scmp.ne.s32.totalorder %s42, %s43
      %p54 = scmp.eq.s32.totalorder %s34, 0
      %p55 = por %p53, %p54
      %p56 = scmp.ne.s32.totalorder %s42, %s43
      %p57 = scmp.eq.s32.totalorder %s35, 1
      %p58 = por %p56, %p57
      %p60 = scmp.ne.s32.totalorder %s43, %s59
      %p61 = scmp.eq.s32.totalorder %s35, 0
      %p62 = por %p60, %p61
      %s63 = ssub.s32 %s29, %s36
      %p64 = scmp.eq.s32.totalorder %s63, 0
      %s66 = sadd.s32 %s65, 1
      %s67 = scalar_select %p64, %s65, %s66
      %p70 = pneg %p64
      %p71 = scmp.eq.s32.totalorder %s29, 1
      %p72 = por %p70, %p71
      %p73 = scmp.ne.s32.totalorder %s65, %s68
      %p74 = scmp.eq.s32.totalorder %s29, 0
      %p75 = por %p73, %p74
      %p76 = scmp.ne.s32.totalorder %s65, %s68
      %p77 = scmp.eq.s32.totalorder %s34, 1
      %p78 = por %p76, %p77
      %p79 = scmp.ne.s32.totalorder %s68, %s69
      %p80 = scmp.eq.s32.totalorder %s34, 0
      %p81 = por %p79, %p80
      %p82 = scmp.ne.s32.totalorder %s68, %s69
      %p83 = scmp.eq.s32.totalorder %s35, 1
      %p84 = por %p82, %p83
      %p86 = scmp.ne.s32.totalorder %s69, %s85
      %p87 = scmp.eq.s32.totalorder %s35, 0
      %p88 = por %p86, %p87
      %s90 = sadd.s32 %s89, 1
      %p93 = scmp.eq.s32.totalorder %s29, 1
      %p94 = scmp.ne.s32.totalorder %s89, %s91
      %p95 = scmp.eq.s32.totalorder %s29, 0
      %p96 = por %p94, %p95
      %p97 = scmp.ne.s32.totalorder %s89, %s91
      %p98 = scmp.eq.s32.totalorder %s34, 1
      %p99 = por %p97, %p98
      %p100 = scmp.ne.s32.totalorder %s91, %s92
      %p101 = scmp.eq.s32.totalorder %s34, 0
      %p102 = por %p100, %p101
      %p103 = scmp.ne.s32.totalorder %s91, %s92
      %p104 = scmp.eq.s32.totalorder %s35, 1
      %p105 = por %p103, %p104
      %p107 = scmp.ne.s32.totalorder %s92, %s106
      %p108 = scmp.eq.s32.totalorder %s35, 0
      %p109 = por %p107, %p108
      %s111 = sadd.s32 %s110, 1
      %p114 = scmp.eq.s32.totalorder %s29, 1
      %p115 = scmp.ne.s32.totalorder %s110, %s112
      %p116 = scmp.eq.s32.totalorder %s29, 0
      %p117 = por %p115, %p116
      %p118 = scmp.ne.s32.totalorder %s110, %s112
      %p119 = scmp.eq.s32.totalorder %s34, 1
      %p120 = por %p118, %p119
      %p121 = scmp.ne.s32.totalorder %s112, %s113
      %p122 = scmp.eq.s32.totalorder %s34, 0
      %p123 = por %p121, %p122
      %p124 = scmp.ne.s32.totalorder %s112, %s113
      %p125 = scmp.eq.s32.totalorder %s35, 1
      %p126 = por %p124, %p125
      %p128 = scmp.ne.s32.totalorder %s113, %s127
      %p129 = scmp.eq.s32.totalorder %s35, 0
      %p130 = por %p128, %p129
      %s132 = sadd.s32 %s131, 1
      %p135 = scmp.eq.s32.totalorder %s29, 1
      %p136 = scmp.ne.s32.totalorder %s131, %s133
      %p137 = scmp.eq.s32.totalorder %s29, 0
      %p138 = por %p136, %p137
      %p139 = scmp.ne.s32.totalorder %s131, %s133
      %p140 = scmp.eq.s32.totalorder %s34, 1
      %p141 = por %p139, %p140
      %p142 = scmp.ne.s32.totalorder %s133, %s134
      %p143 = scmp.eq.s32.totalorder %s34, 0
      %p144 = por %p142, %p143
      %p145 = scmp.ne.s32.totalorder %s133, %s134
      %p146 = scmp.eq.s32.totalorder %s35, 1
      %p147 = por %p145, %p146
      %p149 = scmp.ne.s32.totalorder %s134, %s148
      %p150 = scmp.eq.s32.totalorder %s35, 0
      %p151 = por %p149, %p150
      %s153 = sadd.s32 %s152, 1
      %p156 = scmp.eq.s32.totalorder %s29, 1
      %p157 = scmp.ne.s32.totalorder %s152, %s154
      %p158 = scmp.eq.s32.totalorder %s29, 0
      %p159 = por %p157, %p158
      %p160 = scmp.ne.s32.totalorder %s152, %s154
      %p161 = scmp.eq.s32.totalorder %s34, 1
      %p162 = por %p160, %p161
      %p163 = scmp.ne.s32.totalorder %s154, %s155
      %p164 = scmp.eq.s32.totalorder %s34, 0
      %p165 = por %p163, %p164
      %p166 = scmp.ne.s32.totalorder %s154, %s155
      %p167 = scmp.eq.s32.totalorder %s35, 1
      %p168 = por %p166, %p167
      %p170 = scmp.ne.s32.totalorder %s155, %s169
      %p171 = scmp.eq.s32.totalorder %s35, 0
      %p172 = por %p170, %p171
      %s174 = sadd.s32 %s173, 1
      %p177 = scmp.eq.s32.totalorder %s29, 1
      %p178 = scmp.ne.s32.totalorder %s173, %s175
      %p179 = scmp.eq.s32.totalorder %s29, 0
      %p180 = por %p178, %p179
      %p181 = scmp.ne.s32.totalorder %s173, %s175
      %p182 = scmp.eq.s32.totalorder %s34, 1
      %p183 = por %p181, %p182
      %p184 = scmp.ne.s32.totalorder %s175, %s176
      %p185 = scmp.eq.s32.totalorder %s34, 0
      %p186 = por %p184, %p185
      %p187 = scmp.ne.s32.totalorder %s175, %s176
      %p188 = scmp.eq.s32.totalorder %s35, 1
      %p189 = por %p187, %p188
      %p191 = scmp.ne.s32.totalorder %s176, %s190
      %p192 = scmp.eq.s32.totalorder %s35, 0
      %p193 = por %p191, %p192
      %s195 = sadd.s32 %s194, 1
      %p198 = scmp.eq.s32.totalorder %s29, 1
      %p199 = scmp.ne.s32.totalorder %s194, %s196
      %p200 = scmp.eq.s32.totalorder %s29, 0
      %p201 = por %p199, %p200
      %p202 = scmp.ne.s32.totalorder %s194, %s196
      %p203 = scmp.eq.s32.totalorder %s34, 1
      %p204 = por %p202, %p203
      %p205 = scmp.ne.s32.totalorder %s196, %s197
      %p206 = scmp.eq.s32.totalorder %s34, 0
      %p207 = por %p205, %p206
      %p208 = scmp.ne.s32.totalorder %s196, %s197
      %p209 = scmp.eq.s32.totalorder %s35, 1
      %p210 = por %p208, %p209
      %p212 = scmp.ne.s32.totalorder %s197, %s211
      %p213 = scmp.eq.s32.totalorder %s35, 0
      %p214 = por %p212, %p213
      %s216 = sadd.s32 %s215, 1
      %p219 = scmp.eq.s32.totalorder %s29, 1
      %p220 = scmp.ne.s32.totalorder %s215, %s217
      %p221 = scmp.eq.s32.totalorder %s29, 0
      %p222 = por %p220, %p221
      %p223 = scmp.ne.s32.totalorder %s215, %s217
      %p224 = scmp.eq.s32.totalorder %s34, 1
      %p225 = por %p223, %p224
      %p226 = scmp.ne.s32.totalorder %s217, %s218
      %p227 = scmp.eq.s32.totalorder %s34, 0
      %p228 = por %p226, %p227
      %p229 = scmp.ne.s32.totalorder %s217, %s218
      %p230 = scmp.eq.s32.totalorder %s35, 1
      %p231 = por %p229, %p230
      %p233 = scmp.ne.s32.totalorder %s218, %s232
      %p234 = scmp.eq.s32.totalorder %s35, 0
      %p235 = por %p233, %p234
      %s237 = sadd.s32 %s236, 1
      %p240 = scmp.eq.s32.totalorder %s29, 1
      %p241 = scmp.ne.s32.totalorder %s236, %s238
      %p242 = scmp.eq.s32.totalorder %s29, 0
      %p243 = por %p241, %p242
      %p244 = scmp.ne.s32.totalorder %s236, %s238
      %p245 = scmp.eq.s32.totalorder %s34, 1
      %p246 = por %p244, %p245
      %p247 = scmp.ne.s32.totalorder %s238, %s239
      %p248 = scmp.eq.s32.totalorder %s34, 0
      %p249 = por %p247, %p248
      %p250 = scmp.ne.s32.totalorder %s238, %s239
      %p251 = scmp.eq.s32.totalorder %s35, 1
      %p252 = por %p250, %p251
      %p254 = scmp.ne.s32.totalorder %s239, %s253
      %p255 = scmp.eq.s32.totalorder %s35, 0
      %p256 = por %p254, %p255
      %s258 = sadd.s32 %s257, 1
      %p261 = scmp.eq.s32.totalorder %s29, 1
      %p262 = scmp.ne.s32.totalorder %s257, %s259
      %p263 = scmp.eq.s32.totalorder %s29, 0
      %p264 = por %p262, %p263
      %p265 = scmp.ne.s32.totalorder %s257, %s259
      %p266 = scmp.eq.s32.totalorder %s34, 1
      %p267 = por %p265, %p266
      %p268 = scmp.ne.s32.totalorder %s259, %s260
      %p269 = scmp.eq.s32.totalorder %s34, 0
      %p270 = por %p268, %p269
      %p271 = scmp.ne.s32.totalorder %s259, %s260
      %p272 = scmp.eq.s32.totalorder %s35, 1
      %p273 = por %p271, %p272
      %p275 = scmp.ne.s32.totalorder %s260, %s274
      %p276 = scmp.eq.s32.totalorder %s35, 0
      %p277 = por %p275, %p276
      %s279 = sadd.s32 %s278, 1
      %p282 = scmp.eq.s32.totalorder %s29, 1
      %p283 = scmp.ne.s32.totalorder %s278, %s280
      %p284 = scmp.eq.s32.totalorder %s29, 0
      %p285 = por %p283, %p284
      %p286 = scmp.ne.s32.totalorder %s278, %s280
      %p287 = scmp.eq.s32.totalorder %s34, 1
      %p288 = por %p286, %p287
      %p289 = scmp.ne.s32.totalorder %s280, %s281
      %p290 = scmp.eq.s32.totalorder %s34, 0
      %p291 = por %p289, %p290
      %p292 = scmp.ne.s32.totalorder %s280, %s281
      %p293 = scmp.eq.s32.totalorder %s35, 1
      %p294 = por %p292, %p293
      %p296 = scmp.ne.s32.totalorder %s281, %s295
      %p297 = scmp.eq.s32.totalorder %s35, 0
      %p298 = por %p296, %p297
      %s299 = ssub.s32 %s29, %s36
      %p300 = scmp.eq.s32.totalorder %s299, 0
      %s302 = sadd.s32 %s301, 1
      %s303 = scalar_select %p300, %s301, %s302
      %p306 = pneg %p300
      %p307 = scmp.eq.s32.totalorder %s29, 1
      %p308 = por %p306, %p307
      %p309 = scmp.ne.s32.totalorder %s301, %s304
      %p310 = scmp.eq.s32.totalorder %s29, 0
      %p311 = por %p309, %p310
      %p312 = scmp.ne.s32.totalorder %s301, %s304
      %p313 = scmp.eq.s32.totalorder %s34, 1
      %p314 = por %p312, %p313
      %p315 = scmp.ne.s32.totalorder %s304, %s305
      %p316 = scmp.eq.s32.totalorder %s34, 0
      %p317 = por %p315, %p316
      %p318 = scmp.ne.s32.totalorder %s304, %s305
      %p319 = scmp.eq.s32.totalorder %s35, 1
      %p320 = por %p318, %p319
      %p322 = scmp.ne.s32.totalorder %s305, %s321
      %p323 = scmp.eq.s32.totalorder %s35, 0
      %p324 = por %p322, %p323
      %s325 = ssub.s32 %s29, %s36
      %p326 = scmp.eq.s32.totalorder %s325, 0
      %s328 = sadd.s32 %s327, 1
      %s329 = scalar_select %p326, %s327, %s328
      %p332 = pneg %p326
      %p333 = scmp.eq.s32.totalorder %s29, 1
      %p334 = por %p332, %p333
      %p335 = scmp.ne.s32.totalorder %s327, %s330
      %p336 = scmp.eq.s32.totalorder %s29, 0
      %p337 = por %p335, %p336
      %p338 = scmp.ne.s32.totalorder %s327, %s330
      %p339 = scmp.eq.s32.totalorder %s34, 1
      %p340 = por %p338, %p339
      %p341 = scmp.ne.s32.totalorder %s330, %s331
      %p342 = scmp.eq.s32.totalorder %s34, 0
      %p343 = por %p341, %p342
      %p344 = scmp.ne.s32.totalorder %s330, %s331
      %p345 = scmp.eq.s32.totalorder %s35, 1
      %p346 = por %p344, %p345
      %p348 = scmp.ne.s32.totalorder %s331, %s347
      %p349 = scmp.eq.s32.totalorder %s35, 0
      %p350 = por %p348, %p349
      %p351 = scmp.le.s32.totalorder 1, %s29
      %p352 = scmp.lt.s32.totalorder %s29, 3
      %p353 = pnand %p351, %p352
      %p354 = pneg %p353
      // Predicated region
      $region9: #{encoder_decoder.1} parent=5 // pred_check
        _
      $region10: #{encoder_decoder.1} parent=5 // pred_check_branch
        %356 = sbr.rel (%p353) target = $region12
      $region11: #{encoder_decoder.1} parent=5 // pred_region
        %s357 = ssub.s32 %s29, 1
        // Predicated region
        $region13: #{encoder_decoder.1} parent=11 // pred_check
          %p358 = pneg %p102
        $region14: #{encoder_decoder.1} parent=11 // pred_check_branch
          %360 = sbr.rel (%p358) target = $region16
        $region15: #{encoder_decoder.1} parent=11 // pred_region
          _
        $region16: #{encoder_decoder.1} parent=11 // pred_fallthru
          _
        // Predicated region
        $region17: #{encoder_decoder.1} parent=11 // pred_check
          %p361 = pneg %p123
        $region18: #{encoder_decoder.1} parent=11 // pred_check_branch
          %363 = sbr.rel (%p361) target = $region20
        $region19: #{encoder_decoder.1} parent=11 // pred_region
          _
        $region20: #{encoder_decoder.1} parent=11 // pred_fallthru
          _
        // Predicated region
        $region21: #{encoder_decoder.1} parent=11 // pred_check
          %p364 = pneg %p144
        $region22: #{encoder_decoder.1} parent=11 // pred_check_branch
          %366 = sbr.rel (%p364) target = $region24
        $region23: #{encoder_decoder.1} parent=11 // pred_region
          _
        $region24: #{encoder_decoder.1} parent=11 // pred_fallthru
          _
        // Predicated region
        $region25: #{encoder_decoder.1} parent=11 // pred_check
          %p367 = pneg %p165
        $region26: #{encoder_decoder.1} parent=11 // pred_check_branch
          %369 = sbr.rel (%p367) target = $region28
        $region27: #{encoder_decoder.1} parent=11 // pred_region
          _
        $region28: #{encoder_decoder.1} parent=11 // pred_fallthru
          _
        // Predicated region
        $region29: #{encoder_decoder.1} parent=11 // pred_check
          %p370 = pneg %p186
        $region30: #{encoder_decoder.1} parent=11 // pred_check_branch
          %372 = sbr.rel (%p370) target = $region32
        $region31: #{encoder_decoder.1} parent=11 // pred_region
          _
        $region32: #{encoder_decoder.1} parent=11 // pred_fallthru
          _
        // Predicated region
        $region33: #{encoder_decoder.1} parent=11 // pred_check
          %p373 = pneg %p207
        $region34: #{encoder_decoder.1} parent=11 // pred_check_branch
          %375 = sbr.rel (%p373) target = $region36
        $region35: #{encoder_decoder.1} parent=11 // pred_region
          _
        $region36: #{encoder_decoder.1} parent=11 // pred_fallthru
          _
        // Predicated region
        $region37: #{encoder_decoder.1} parent=11 // pred_check
          %p376 = pneg %p228
        $region38: #{encoder_decoder.1} parent=11 // pred_check_branch
          %378 = sbr.rel (%p376) target = $region40
        $region39: #{encoder_decoder.1} parent=11 // pred_region
          %s380 = ssub.s32 2048, 2048
          %381 = vsyncadd [#allocation7], %s380
          %s382 = sshll.u32 [#allocation6], 4
          %s383 = int_to_ptr.vmem [resolvable:$true] %s382
          %388 = dma.hbm_to_vmem [thread:$0]  %s8, 2048, %s383, [#allocation7], 128, 128, 8
        $region40: #{encoder_decoder.1} parent=11 // pred_fallthru
          _
        // Predicated region
        $region41: #{encoder_decoder.1} parent=11 // pred_check
          %p389 = pneg %p249
        $region42: #{encoder_decoder.1} parent=11 // pred_check_branch
          %391 = sbr.rel (%p389) target = $region44
        $region43: #{encoder_decoder.1} parent=11 // pred_region
          _
        $region44: #{encoder_decoder.1} parent=11 // pred_fallthru
          _
        // Predicated region
        $region45: #{encoder_decoder.1} parent=11 // pred_check
          %p392 = pneg %p270
        $region46: #{encoder_decoder.1} parent=11 // pred_check_branch
          %394 = sbr.rel (%p392) target = $region48
        $region47: #{encoder_decoder.1} parent=11 // pred_region
          %s396 = ssub.s32 6144, 6144
          %397 = vsyncadd [#allocation7], %s396
          %s398 = sshll.u32 [#allocation8], 4
          %s399 = int_to_ptr.vmem [resolvable:$true] %s398
          %404 = dma.hbm_to_vmem [thread:$0]  %s10, 6144, %s399, [#allocation7], 384, 384, 24
        $region48: #{encoder_decoder.1} parent=11 // pred_fallthru
          _
        // Predicated region
        $region49: #{encoder_decoder.1} parent=11 // pred_check
          %p405 = pneg %p291
        $region50: #{encoder_decoder.1} parent=11 // pred_check_branch
          %407 = sbr.rel (%p405) target = $region52
        $region51: #{encoder_decoder.1} parent=11 // pred_region
          _
        $region52: #{encoder_decoder.1} parent=11 // pred_fallthru
          _
      $region12: #{encoder_decoder.1} parent=5 // pred_fallthru
        _
      %p408 = scmp.lt.s32.totalorder %s29, 2
      // Predicated region
      $region53: #{encoder_decoder.1} parent=5 // pred_check
        %p409 = pneg %p408
      $region54: #{encoder_decoder.1} parent=5 // pred_check_branch
        %411 = sbr.rel (%p409) target = $region56
      $region55: #{encoder_decoder.1} parent=5 // pred_region
        // Predicated region
        $region57: #{encoder_decoder.1} parent=55 // pred_check
          %p412 = pneg %p49
        $region58: #{encoder_decoder.1} parent=55 // pred_check_branch
          %414 = sbr.rel (%p412) target = $region60
        $region59: #{encoder_decoder.1} parent=55 // pred_region
          %s415 = sand.u32 %s39, 1
          %s416 = scalar_lea.sflag [#allocation4], %s415
          %s417 = sand.u32 %s39, 1
          %s418 = smul.addr %s417, 312
          %s419 = scalar_lea.vmem [#allocation3], %s418
          %s420 = smul.u32 13, %s29
          %s421 = ssub.s32 25, %s420
          %p422 = scmp.lt.s32.totalorder %s421, 13
          %s423 = scalar_select %p422, %s421, 13
          %s424 = smul.u32 128, %s423
          %s425 = smul.u32 %s424, 3
          %s427 = ssub.s32 4992, %s425
          %428 = vsyncadd %s416, %s427
          %p429 = scmp.ne.s32.totalorder 0, %s425
          %s430 = smul.addr %s420, 3
          %s431 = smul.addr %s430, 128
          %s432 = scalar_lea.hbm %s0, %s431
          %s433 = smul.u32 24, %s423
          %s434 = sshll.u32 %s419, 4
          %s435 = int_to_ptr.vmem [resolvable:$true] %s434
          %s436 = sshll.u32 %s433, 4
          %440 = dma.hbm_to_vmem [thread:$0]  (%p429), %s432, %s436, %s435, %s416, 384, 384, 24
        $region60: #{encoder_decoder.1} parent=55 // pred_fallthru
          _
        // Predicated region
        $region61: #{encoder_decoder.1} parent=55 // pred_check
          %p441 = pneg %p75
        $region62: #{encoder_decoder.1} parent=55 // pred_check_branch
          %443 = sbr.rel (%p441) target = $region64
        $region63: #{encoder_decoder.1} parent=55 // pred_region
          %s444 = smul.u32 13, %s29
          %s445 = ssub.s32 25, %s444
          %p446 = scmp.lt.s32.totalorder %s445, 13
          %s447 = scalar_select %p446, %s445, 13
          %s448 = smul.u32 128, %s447
          %p449 = scmp.lt.s32.totalorder %s444, 24
          %s450 = scalar_select %p449, %s444, 24
          %s451 = smul.addr %s450, 8
          %s452 = scalar_lea.vmem %s1, %s451
          %s453 = smul.u32 13, %s29
          %s454 = ssub.s32 25, %s453
          %p455 = scmp.lt.s32.totalorder %s454, 13
          %s456 = scalar_select %p455, %s454, 13
          %s457 = smul.u32 128, %s456
        $region64: #{encoder_decoder.1} parent=55 // pred_fallthru
          _
      $region56: #{encoder_decoder.1} parent=5 // pred_fallthru
        _
      %p458 = scmp.le.s32.totalorder 1, %s29
      %p459 = scmp.lt.s32.totalorder %s29, 3
      %p460 = pnand %p458, %p459
      %p461 = pneg %p460
      // Predicated region
      $region65: #{encoder_decoder.1} parent=5 // pred_check
        _
      $region66: #{encoder_decoder.1} parent=5 // pred_check_branch
        %463 = sbr.rel (%p460) target = $region68
      $region67: #{encoder_decoder.1} parent=5 // pred_region
        %s464 = ssub.s32 %s29, 1
        %s465 = sand.u32 %s42, 1
        %s466 = scalar_lea.sflag [#allocation4], %s465
        %s467 = sand.u32 %s42, 1
        %s468 = smul.addr %s467, 312
        %s469 = scalar_lea.vmem [#allocation3], %s468
        // Predicated region
        $region69: #{encoder_decoder.1} parent=67 // pred_check
          %p470 = pneg %p55
        $region70: #{encoder_decoder.1} parent=67 // pred_check_branch
          %472 = sbr.rel (%p470) target = $region72
        $region71: #{encoder_decoder.1} parent=67 // pred_region
          %473 = dma.done %s466, 4992
        $region72: #{encoder_decoder.1} parent=67 // pred_fallthru
          _
        // Predicated region
        $region73: #{encoder_decoder.1} parent=67 // pred_check
          %p474 = pneg %p228
        $region74: #{encoder_decoder.1} parent=67 // pred_check_branch
          %476 = sbr.rel (%p474) target = $region76
        $region75: #{encoder_decoder.1} parent=67 // pred_region
          %477 = dma.done [#allocation7], 2048
        $region76: #{encoder_decoder.1} parent=67 // pred_fallthru
          _
        // Predicated region
        $region77: #{encoder_decoder.1} parent=67 // pred_check
          %p478 = pneg %p270
        $region78: #{encoder_decoder.1} parent=67 // pred_check_branch
          %480 = sbr.rel (%p478) target = $region80
        $region79: #{encoder_decoder.1} parent=67 // pred_region
          %481 = dma.done [#allocation7], 6144
        $region80: #{encoder_decoder.1} parent=67 // pred_fallthru
          _
        %s482 = sand.u32 %s42, 1
        %s483 = scalar_lea.sflag [#allocation4], %s482
        %s484 = sand.u32 %s42, 1
        %s485 = smul.addr %s484, 312
        %s486 = scalar_lea.vmem [#allocation3], %s485
        %p487 = pneg %p55
        %p488 = pneg %p52
        %s489 = smul.u32 13, %s34
        %s490 = ssub.s32 25, %s489
        %p491 = scmp.lt.s32.totalorder %s490, 13
        %s492 = scalar_select %p491, %s490, 13
        %s493 = smul.u32 128, %s492
        %p494 = scmp.lt.s32.totalorder %s489, 24
        %s495 = scalar_select %p494, %s489, 24
        %s496 = smul.addr %s495, 8
        %s497 = scalar_lea.vmem %s1, %s496
        %p498 = pneg %p81
        %p499 = pneg %p78
        %p500 = pneg %p102
        %p501 = pneg %p99
        %p502 = pneg %p123
        %p503 = pneg %p120
        %p504 = pneg %p144
        %p505 = pneg %p141
        %p506 = pneg %p165
        %p507 = pneg %p162
        %p508 = pneg %p186
        %p509 = pneg %p183
        %p510 = pneg %p207
        %p511 = pneg %p204
        %p512 = pneg %p228
        %p513 = pneg %p225
        %p514 = pneg %p249
        %p515 = pneg %p246
        %p516 = pneg %p270
        %p517 = pneg %p267
        %p518 = pneg %p291
        %p519 = pneg %p288
        %p520 = pneg %p317
        %p521 = pneg %p314
        %s522 = sand.u32 %s304, 1
        %s523 = sand.u32 %s304, 1
        %s524 = smul.addr %s523, 104
        %s525 = scalar_lea.vmem [#allocation9], %s524
        %p526 = pneg %p343
        %p527 = pneg %p340
        %s528 = sand.u32 %s330, 1
        %s529 = scalar_lea.sflag [#allocation5], %s528
        %s530 = sand.u32 %s330, 1
        %s531 = smul.addr %s530, 312
        %s532 = scalar_lea.vmem [#allocation10], %s531
        %s533 = smul.u32 13, %s34
        %s534 = ssub.s32 25, %s533
        %p535 = scmp.lt.s32.totalorder %s534, 13
        %s536 = scalar_select %p535, %s534, 13
        %s537 = smul.u32 128, %s536
        %s538 = smul.u32 %s537, 3
        %s539 = smul.u32 13, %s34
        %s540 = ssub.s32 25, %s539
        %p541 = scmp.lt.s32.totalorder %s540, 13
        %s542 = scalar_select %p541, %s540, 13
        %s543 = smul.u32 128, %s542
        %p544 = scmp.lt.s32.totalorder %s539, 24
        %s545 = scalar_select %p544, %s539, 24
        %s546 = smul.addr %s545, 8
        %s547 = scalar_lea.vmem %s1, %s546
        %s548 = smul.u32 13, %s34
        %s549 = ssub.s32 25, %s548
        %p550 = scmp.lt.s32.totalorder %s549, 13
        %s551 = scalar_select %p550, %s549, 13
        %s552 = smul.u32 128, %s551
        %s553 = smul.u32 13, %s34
        %s554 = ssub.s32 25, %s553
        %p555 = scmp.lt.s32.totalorder %s554, 13
        %s556 = scalar_select %p555, %s554, 13
        %s557 = smul.u32 128, %s556
        %s558 = smul.u32 13, %s34
        %s559 = ssub.s32 25, %s558
        %p560 = scmp.lt.s32.totalorder %s559, 13
        %s561 = scalar_select %p560, %s559, 13
        %s562 = smul.u32 128, %s561
        %s563 = smul.u32 %s562, 3
        %v564 = vld [vmem:[%s469] sm:$0xff]
        %v565 = vld [vmem:[%s469 + $0x8] sm:$0xff]
        %v566 = vld [vmem:[%s469 + $0x10] sm:$0xff]
        %v567 = vld [vmem:[%s469 + $0x18] sm:$0xff]
        %v568 = vld [vmem:[%s469 + $0x20] sm:$0xff]
        %v569 = vld [vmem:[%s469 + $0x28] sm:$0xff]
        %v570 = vld [vmem:[%s469 + $0x30] sm:$0xff]
        %v571 = vld [vmem:[%s469 + $0x38] sm:$0xff]
        %v572 = vld [vmem:[%s469 + $0x40] sm:$0xff]
        %v573 = vld [vmem:[%s469 + $0x48] sm:$0xff]
        %v574 = vld [vmem:[%s469 + $0x50] sm:$0xff]
        %v575 = vld [vmem:[%s469 + $0x58] sm:$0xff]
        %v576 = vld [vmem:[%s469 + $0x60] sm:$0xff]
        %v577 = vld [vmem:[%s469 + $0x68] sm:$0xff]
        %v578 = vld [vmem:[%s469 + $0x70] sm:$0xff]
        %v579 = vld [vmem:[%s469 + $0x78] sm:$0xff]
        %v580 = vld [vmem:[%s469 + $0x80] sm:$0xff]
        %v581 = vld [vmem:[%s469 + $0x88] sm:$0xff]
        %v582 = vld [vmem:[%s469 + $0x90] sm:$0xff]
        %v583 = vld [vmem:[%s469 + $0x98] sm:$0xff]
        %v584 = vld [vmem:[%s469 + $0xa0] sm:$0xff]
        %v585 = vld [vmem:[%s469 + $0xa8] sm:$0xff]
        %v586 = vld [vmem:[%s469 + $0xb0] sm:$0xff]
        %v587 = vld [vmem:[%s469 + $0xb8] sm:$0xff]
        %v588 = vld [vmem:[%s469 + $0xc0] sm:$0xff]
        %v589 = vld [vmem:[%s469 + $0xc8] sm:$0xff]
        %v590 = vld [vmem:[%s469 + $0xd0] sm:$0xff]
        %v591 = vld [vmem:[%s469 + $0xd8] sm:$0xff]
        %v592 = vld [vmem:[%s469 + $0xe0] sm:$0xff]
        %v593 = vld [vmem:[%s469 + $0xe8] sm:$0xff]
        %v594 = vld [vmem:[%s469 + $0xf0] sm:$0xff]
        %v595 = vld [vmem:[%s469 + $0xf8] sm:$0xff]
        %v596 = vld [vmem:[%s469 + $0x100] sm:$0xff]
        %v597 = vld [vmem:[%s469 + $0x108] sm:$0xff]
        %v598 = vld [vmem:[%s469 + $0x110] sm:$0xff]
        %v599 = vld [vmem:[%s469 + $0x118] sm:$0xff]
        %v600 = vld [vmem:[%s469 + $0x120] sm:$0xff]
        %v601 = vld [vmem:[%s469 + $0x128] sm:$0xff]
        %v602 = vld [vmem:[%s469 + $0x130] sm:$0xff]
        %v603 = vld [vmem:[%s2] sm:$0x7]
        %v605 = vlaneseq
        %v606 = vshrl.u32 %v605, 7
        %v607 = vsub.s32 0, %v606
        %v608 = vrot.slane %v603, %v607
        %v609 = vlaneseq
        %v610 = vshrl.u32 %v609, 7
        %v611 = vsub.s32 1, %v610
        %v612 = vrot.slane %v603, %v611
        %v613 = vlaneseq
        %v614 = vshrl.u32 %v613, 7
        %v615 = vsub.s32 2, %v614
        %v616 = vrot.slane %v603, %v615
        %v620 = vmul.f32 %v564, %v608
        %v621 = vmul.f32 %v565, %v612
        %v622 = vmul.f32 %v566, %v616
        %v623 = vmul.f32 %v567, %v608
        %v624 = vmul.f32 %v568, %v612
        %v625 = vmul.f32 %v569, %v616
        %v626 = vmul.f32 %v570, %v608
        %v627 = vmul.f32 %v571, %v612
        %v628 = vmul.f32 %v572, %v616
        %v629 = vmul.f32 %v573, %v608
        %v630 = vmul.f32 %v574, %v612
        %v631 = vmul.f32 %v575, %v616
        %v632 = vmul.f32 %v576, %v608
        %v633 = vmul.f32 %v577, %v612
        %v634 = vmul.f32 %v578, %v616
        %v635 = vmul.f32 %v579, %v608
        %v636 = vmul.f32 %v580, %v612
        %v637 = vmul.f32 %v581, %v616
        %v638 = vmul.f32 %v582, %v608
        %v639 = vmul.f32 %v583, %v612
        %v640 = vmul.f32 %v584, %v616
        %v641 = vmul.f32 %v585, %v608
        %v642 = vmul.f32 %v586, %v612
        %v643 = vmul.f32 %v587, %v616
        %v644 = vmul.f32 %v588, %v608
        %v645 = vmul.f32 %v589, %v612
        %v646 = vmul.f32 %v590, %v616
        %v647 = vmul.f32 %v591, %v608
        %v648 = vmul.f32 %v592, %v612
        %v649 = vmul.f32 %v593, %v616
        %v650 = vmul.f32 %v594, %v608
        %v651 = vmul.f32 %v595, %v612
        %v652 = vmul.f32 %v596, %v616
        %v653 = vmul.f32 %v597, %v608
        %v654 = vmul.f32 %v598, %v612
        %v655 = vmul.f32 %v599, %v616
        %v656 = vmul.f32 %v600, %v608
        %v657 = vmul.f32 %v601, %v612
        %v658 = vmul.f32 %v602, %v616
        %v659 = vadd.f32 %v620, %v621
        %v660 = vadd.f32 %v659, %v622
        %661 = vadd.xlane.f32.xlu0 %v660
        %v662 = vpop.xlane.xlu0 %661
        %v663 = vadd.f32 %v623, %v624
        %v664 = vadd.f32 %v663, %v625
        %665 = vadd.xlane.f32.xlu0 %v664
        %v666 = vpop.xlane.xlu0 %665
        %v667 = vadd.f32 %v626, %v627
        %v668 = vadd.f32 %v667, %v628
        %669 = vadd.xlane.f32.xlu0 %v668
        %v670 = vpop.xlane.xlu0 %669
        %v671 = vadd.f32 %v629, %v630
        %v672 = vadd.f32 %v671, %v631
        %673 = vadd.xlane.f32.xlu0 %v672
        %v674 = vpop.xlane.xlu0 %673
        %v675 = vadd.f32 %v632, %v633
        %v676 = vadd.f32 %v675, %v634
        %677 = vadd.xlane.f32.xlu0 %v676
        %v678 = vpop.xlane.xlu0 %677
        %v679 = vadd.f32 %v635, %v636
        %v680 = vadd.f32 %v679, %v637
        %681 = vadd.xlane.f32.xlu0 %v680
        %v682 = vpop.xlane.xlu0 %681
        %v683 = vadd.f32 %v638, %v639
        %v684 = vadd.f32 %v683, %v640
        %685 = vadd.xlane.f32.xlu0 %v684
        %v686 = vpop.xlane.xlu0 %685
        %v687 = vadd.f32 %v641, %v642
        %v688 = vadd.f32 %v687, %v643
        %689 = vadd.xlane.f32.xlu0 %v688
        %v690 = vpop.xlane.xlu0 %689
        %v691 = vadd.f32 %v644, %v645
        %v692 = vadd.f32 %v691, %v646
        %693 = vadd.xlane.f32.xlu0 %v692
        %v694 = vpop.xlane.xlu0 %693
        %v695 = vadd.f32 %v647, %v648
        %v696 = vadd.f32 %v695, %v649
        %697 = vadd.xlane.f32.xlu0 %v696
        %v698 = vpop.xlane.xlu0 %697
        %v699 = vadd.f32 %v650, %v651
        %v700 = vadd.f32 %v699, %v652
        %701 = vadd.xlane.f32.xlu0 %v700
        %v702 = vpop.xlane.xlu0 %701
        %v703 = vadd.f32 %v653, %v654
        %v704 = vadd.f32 %v703, %v655
        %705 = vadd.xlane.f32.xlu0 %v704
        %v706 = vpop.xlane.xlu0 %705
        %v707 = vadd.f32 %v656, %v657
        %v708 = vadd.f32 %v707, %v658
        %709 = vadd.xlane.f32.xlu0 %v708
        %v710 = vpop.xlane.xlu0 %709
        %v711 = vld [vmem:[#allocation2] sm:$0x1]
        %v713 = vlaneseq
        %v714 = vshrl.u32 %v713, 7
        %v715 = vsub.s32 0, %v714
        %v716 = vrot.slane %v711, %v715
        %v718 = vadd.f32 %v662, %v716
        %v719 = vadd.f32 %v666, %v716
        %v720 = vadd.f32 %v670, %v716
        %v721 = vadd.f32 %v674, %v716
        %v722 = vadd.f32 %v678, %v716
        %v723 = vadd.f32 %v682, %v716
        %v724 = vadd.f32 %v686, %v716
        %v725 = vadd.f32 %v690, %v716
        %v726 = vadd.f32 %v694, %v716
        %v727 = vadd.f32 %v698, %v716
        %v728 = vadd.f32 %v702, %v716
        %v729 = vadd.f32 %v706, %v716
        %v730 = vadd.f32 %v710, %v716
        %vm731 = vcmask 7168
        %732 = vst.msk [vmem:[%s525] sm:$0xff] %vm731, %v718
        %733 = vst.msk [vmem:[%s525 + $0x8] sm:$0xff] %vm731, %v719
        %734 = vst.msk [vmem:[%s525 + $0x10] sm:$0xff] %vm731, %v720
        %735 = vst.msk [vmem:[%s525 + $0x18] sm:$0xff] %vm731, %v721
        %736 = vst.msk [vmem:[%s525 + $0x20] sm:$0xff] %vm731, %v722
        %737 = vst.msk [vmem:[%s525 + $0x28] sm:$0xff] %vm731, %v723
        %738 = vst.msk [vmem:[%s525 + $0x30] sm:$0xff] %vm731, %v724
        %739 = vst.msk [vmem:[%s525 + $0x38] sm:$0xff] %vm731, %v725
        %740 = vst.msk [vmem:[%s525 + $0x40] sm:$0xff] %vm731, %v726
        %741 = vst.msk [vmem:[%s525 + $0x48] sm:$0xff] %vm731, %v727
        %742 = vst.msk [vmem:[%s525 + $0x50] sm:$0xff] %vm731, %v728
        %743 = vst.msk [vmem:[%s525 + $0x58] sm:$0xff] %vm731, %v729
        %744 = vst.msk [vmem:[%s525 + $0x60] sm:$0xff] %vm731, %v730
        %v745 = vld [vmem:[%s547] sm:$0xff]
        %v746 = vld [vmem:[%s547 + $0x8] sm:$0xff]
        %v747 = vld [vmem:[%s547 + $0x10] sm:$0xff]
        %v748 = vld [vmem:[%s547 + $0x18] sm:$0xff]
        %v749 = vld [vmem:[%s547 + $0x20] sm:$0xff]
        %v750 = vld [vmem:[%s547 + $0x28] sm:$0xff]
        %v751 = vld [vmem:[%s547 + $0x30] sm:$0xff]
        %v752 = vld [vmem:[%s547 + $0x38] sm:$0xff]
        %v753 = vld [vmem:[%s547 + $0x40] sm:$0xff]
        %v754 = vld [vmem:[%s547 + $0x48] sm:$0xff]
        %v755 = vld [vmem:[%s547 + $0x50] sm:$0xff]
        %v756 = vld [vmem:[%s547 + $0x58] sm:$0xff]
        %v757 = vld [vmem:[%s547 + $0x60] sm:$0xff]
        %v758 = vadd.f32 %v718, %v745
        %v759 = vadd.f32 %v719, %v746
        %v760 = vadd.f32 %v720, %v747
        %v761 = vadd.f32 %v721, %v748
        %v762 = vadd.f32 %v722, %v749
        %v763 = vadd.f32 %v723, %v750
        %v764 = vadd.f32 %v724, %v751
        %v765 = vadd.f32 %v725, %v752
        %v766 = vadd.f32 %v726, %v753
        %v767 = vadd.f32 %v727, %v754
        %v768 = vadd.f32 %v728, %v755
        %v769 = vadd.f32 %v729, %v756
        %v770 = vadd.f32 %v730, %v757
        %v771 = vld [vmem:[%s4] sm:$0x1]
        %773 = vset.pattern.permute.xlu0 0
        %774 = vperm.xlu0 %773, %v758
        %v775 = vpop.permute.xlu0 %774
        %778 = vset.pattern.permute.xlu0 0
        %779 = vperm.xlu0 %778, %v759
        %v780 = vpop.permute.xlu0 %779
        %783 = vset.pattern.permute.xlu0 0
        %784 = vperm.xlu0 %783, %v760
        %v785 = vpop.permute.xlu0 %784
        %788 = vset.pattern.permute.xlu0 0
        %789 = vperm.xlu0 %788, %v761
        %v790 = vpop.permute.xlu0 %789
        %793 = vset.pattern.permute.xlu0 0
        %794 = vperm.xlu0 %793, %v762
        %v795 = vpop.permute.xlu0 %794
        %798 = vset.pattern.permute.xlu0 0
        %799 = vperm.xlu0 %798, %v763
        %v800 = vpop.permute.xlu0 %799
        %803 = vset.pattern.permute.xlu0 0
        %804 = vperm.xlu0 %803, %v764
        %v805 = vpop.permute.xlu0 %804
        %808 = vset.pattern.permute.xlu0 0
        %809 = vperm.xlu0 %808, %v765
        %v810 = vpop.permute.xlu0 %809
        %813 = vset.pattern.permute.xlu0 0
        %814 = vperm.xlu0 %813, %v766
        %v815 = vpop.permute.xlu0 %814
        %818 = vset.pattern.permute.xlu0 0
        %819 = vperm.xlu0 %818, %v767
        %v820 = vpop.permute.xlu0 %819
        %823 = vset.pattern.permute.xlu0 0
        %824 = vperm.xlu0 %823, %v768
        %v825 = vpop.permute.xlu0 %824
        %828 = vset.pattern.permute.xlu0 0
        %829 = vperm.xlu0 %828, %v769
        %v830 = vpop.permute.xlu0 %829
        %833 = vset.pattern.permute.xlu0 0
        %834 = vperm.xlu0 %833, %v770
        %v835 = vpop.permute.xlu0 %834
        %v838 = vlaneseq
        %v839 = vshrl.u32 %v838, 7
        %v840 = vsub.s32 0, %v839
        %v841 = vrot.slane %v771, %v840
        %v843 = vmul.f32 %v775, %v841
        %v844 = vmul.f32 %v780, %v841
        %v845 = vmul.f32 %v785, %v841
        %v846 = vmul.f32 %v790, %v841
        %v847 = vmul.f32 %v795, %v841
        %v848 = vmul.f32 %v800, %v841
        %v849 = vmul.f32 %v805, %v841
        %v850 = vmul.f32 %v810, %v841
        %v851 = vmul.f32 %v815, %v841
        %v852 = vmul.f32 %v820, %v841
        %v853 = vmul.f32 %v825, %v841
        %v854 = vmul.f32 %v830, %v841
        %v855 = vmul.f32 %v835, %v841
        %v856 = vld [vmem:[%s5] sm:$0x1]
        %v858 = vlaneseq
        %v859 = vshrl.u32 %v858, 7
        %v860 = vsub.s32 0, %v859
        %v861 = vrot.slane %v856, %v860
        %v863 = vadd.f32 %v843, %v861
        %v864 = vadd.f32 %v844, %v861
        %v865 = vadd.f32 %v845, %v861
        %v866 = vadd.f32 %v846, %v861
        %v867 = vadd.f32 %v847, %v861
        %v868 = vadd.f32 %v848, %v861
        %v869 = vadd.f32 %v849, %v861
        %v870 = vadd.f32 %v850, %v861
        %v871 = vadd.f32 %v851, %v861
        %v872 = vadd.f32 %v852, %v861
        %v873 = vadd.f32 %v853, %v861
        %v874 = vadd.f32 %v854, %v861
        %v875 = vadd.f32 %v855, %v861
        %vm876 = vcmp.gt.f32.partialorder %v863, 0.0
        %vm877 = vcmp.gt.f32.partialorder %v864, 0.0
        %vm878 = vcmp.gt.f32.partialorder %v865, 0.0
        %vm879 = vcmp.gt.f32.partialorder %v866, 0.0
        %vm880 = vcmp.gt.f32.partialorder %v867, 0.0
        %vm881 = vcmp.gt.f32.partialorder %v868, 0.0
        %vm882 = vcmp.gt.f32.partialorder %v869, 0.0
        %vm883 = vcmp.gt.f32.partialorder %v870, 0.0
        %vm884 = vcmp.gt.f32.partialorder %v871, 0.0
        %vm885 = vcmp.gt.f32.partialorder %v872, 0.0
        %vm886 = vcmp.gt.f32.partialorder %v873, 0.0
        %vm887 = vcmp.gt.f32.partialorder %v874, 0.0
        %vm888 = vcmp.gt.f32.partialorder %v875, 0.0
        %v889 = vmin.f32 %v863, 0.0
        %v890 = vmin.f32 %v864, 0.0
        %v891 = vmin.f32 %v865, 0.0
        %v892 = vmin.f32 %v866, 0.0
        %v893 = vmin.f32 %v867, 0.0
        %v894 = vmin.f32 %v868, 0.0
        %v895 = vmin.f32 %v869, 0.0
        %v896 = vmin.f32 %v870, 0.0
        %v897 = vmin.f32 %v871, 0.0
        %v898 = vmin.f32 %v872, 0.0
        %v899 = vmin.f32 %v873, 0.0
        %v900 = vmin.f32 %v874, 0.0
        %v901 = vmin.f32 %v875, 0.0
        %v902 = vmul.f32 %v889, 1.442695
        %v903 = vpow.pop %v902
        %v904 = vmul.f32 %v890, 1.442695
        %v905 = vpow.pop %v904
        %v906 = vmul.f32 %v891, 1.442695
        %v907 = vpow.pop %v906
        %v908 = vmul.f32 %v892, 1.442695
        %v909 = vpow.pop %v908
        %v910 = vmul.f32 %v893, 1.442695
        %v911 = vpow.pop %v910
        %v912 = vmul.f32 %v894, 1.442695
        %v913 = vpow.pop %v912
        %v914 = vmul.f32 %v895, 1.442695
        %v915 = vpow.pop %v914
        %v916 = vmul.f32 %v896, 1.442695
        %v917 = vpow.pop %v916
        %v918 = vmul.f32 %v897, 1.442695
        %v919 = vpow.pop %v918
        %v920 = vmul.f32 %v898, 1.442695
        %v921 = vpow.pop %v920
        %v922 = vmul.f32 %v899, 1.442695
        %v923 = vpow.pop %v922
        %v924 = vmul.f32 %v900, 1.442695
        %v925 = vpow.pop %v924
        %v926 = vmul.f32 %v901, 1.442695
        %v927 = vpow.pop %v926
        %v928 = vsub.f32 %v903, 1.0
        %v929 = vsub.f32 %v905, 1.0
        %v930 = vsub.f32 %v907, 1.0
        %v931 = vsub.f32 %v909, 1.0
        %v932 = vsub.f32 %v911, 1.0
        %v933 = vsub.f32 %v913, 1.0
        %v934 = vsub.f32 %v915, 1.0
        %v935 = vsub.f32 %v917, 1.0
        %v936 = vsub.f32 %v919, 1.0
        %v937 = vsub.f32 %v921, 1.0
        %v938 = vsub.f32 %v923, 1.0
        %v939 = vsub.f32 %v925, 1.0
        %v940 = vsub.f32 %v927, 1.0
        %v941 = vsel %vm876, %v863, %v928
        %v942 = vsel %vm877, %v864, %v929
        %v943 = vsel %vm878, %v865, %v930
        %v944 = vsel %vm879, %v866, %v931
        %v945 = vsel %vm880, %v867, %v932
        %v946 = vsel %vm881, %v868, %v933
        %v947 = vsel %vm882, %v869, %v934
        %v948 = vsel %vm883, %v870, %v935
        %v949 = vsel %vm884, %v871, %v936
        %v950 = vsel %vm885, %v872, %v937
        %v951 = vsel %vm886, %v873, %v938
        %v952 = vsel %vm887, %v874, %v939
        %v953 = vsel %vm888, %v875, %v940
        %v954 = vld [vmem:[%s6] sm:$0xff]
        %v955 = vld [vmem:[%s6 + $0x8] sm:$0xff]
        %v956 = vld [vmem:[%s6 + $0x10] sm:$0xff]
        %v957 = vld [vmem:[%s6 + $0x18] sm:$0xff]
        %v958 = vld [vmem:[%s6 + $0x20] sm:$0xff]
        %v959 = vld [vmem:[%s6 + $0x28] sm:$0xff]
        %v960 = vld [vmem:[%s6 + $0x30] sm:$0xff]
        %v961 = vld [vmem:[%s6 + $0x38] sm:$0xff]
        %v962 = vld [vmem:[%s6 + $0x40] sm:$0xff]
        %v963 = vld [vmem:[%s6 + $0x48] sm:$0xff]
        %v964 = vld [vmem:[%s6 + $0x50] sm:$0xff]
        %v965 = vld [vmem:[%s6 + $0x58] sm:$0xff]
        %v966 = vld [vmem:[%s6 + $0x60] sm:$0xff]
        %v967 = vld [vmem:[%s6 + $0x68] sm:$0xff]
        %v968 = vld [vmem:[%s6 + $0x70] sm:$0xff]
        %v969 = vld [vmem:[%s6 + $0x78] sm:$0xff]
        %v970 = vld [vmem:[%s7] sm:$0x1]
        %v972 = vlaneseq
        %v973 = vshrl.u32 %v972, 7
        %v974 = vsub.s32 0, %v973
        %v975 = vrot.slane %v970, %v974
        %977 = vmatprep.subr.mxu0 0.0
        %978 = vmatpush1.msra.mxu0 %v954
        %979 = vmatprep.subr.mxu0 0.0
        %980 = vmatpush1.msra.mxu0 %v955
        %981 = vmatprep.subr.mxu0 0.0
        %982 = vmatpush1.msra.mxu0 %v956
        %983 = vmatprep.subr.mxu0 0.0
        %984 = vmatpush1.msra.mxu0 %v957
        %985 = vmatprep.subr.mxu0 0.0
        %986 = vmatpush1.msra.mxu0 %v958
        %987 = vmatprep.subr.mxu0 0.0
        %988 = vmatpush1.msra.mxu0 %v959
        %989 = vmatprep.subr.mxu0 0.0
        %990 = vmatpush1.msra.mxu0 %v960
        %991 = vmatprep.subr.mxu0 0.0
        %992 = vmatpush1.msra.mxu0 %v961
        %993 = vmatprep.subr.mxu0 0.0
        %994 = vmatpush1.msra.mxu0 %v962
        %995 = vmatprep.subr.mxu0 0.0
        %996 = vmatpush1.msra.mxu0 %v963
        %997 = vmatprep.subr.mxu0 0.0
        %998 = vmatpush1.msra.mxu0 %v964
        %999 = vmatprep.subr.mxu0 0.0
        %1000 = vmatpush1.msra.mxu0 %v965
        %1001 = vmatprep.subr.mxu0 0.0
        %1002 = vmatpush1.msra.mxu0 %v966
        %1003 = vmatprep.subr.mxu0 0.0
        %1004 = vmatpush1.msra.mxu0 %v967
        %1005 = vmatprep.subr.mxu0 0.0
        %1006 = vmatpush1.msra.mxu0 %v968
        %1007 = vmatprep.subr.mxu0 0.0
        %1008 = vmatpush1.msra.mxu0 %v969
        %1009 = vmatprep.subr.mxu0 0.0
        %1010 = vmatpush1.msra.mxu0 0.0
        %1011 = vmatprep.subr.mxu0 0.0
        %1012 = vmatpush1.msra.mxu0 0.0
        %1013 = vmatprep.subr.mxu0 0.0
        %1014 = vmatpush1.msra.mxu0 0.0
        %1015 = vmatprep.subr.mxu0 0.0
        %1016 = vmatpush1.msra.mxu0 0.0
        %1017 = vmatprep.subr.mxu0 0.0
        %1018 = vmatpush1.msra.mxu0 0.0
        %1019 = vmatprep.subr.mxu0 0.0
        %1020 = vmatpush1.msra.mxu0 0.0
        %1021 = vmatprep.subr.mxu0 0.0
        %1022 = vmatpush1.msra.mxu0 0.0
        %1023 = vmatprep.subr.mxu0 0.0
        %1024 = vmatpush1.msra.mxu0 0.0
        %1025 = vmatprep.subr.mxu0 0.0
        %1026 = vmatpush1.msra.mxu0 0.0
        %1027 = vmatprep.subr.mxu0 0.0
        %1028 = vmatpush1.msra.mxu0 0.0
        %1029 = vmatprep.subr.mxu0 0.0
        %1030 = vmatpush1.msra.mxu0 0.0
        %1031 = vmatprep.subr.mxu0 0.0
        %1032 = vmatpush1.msra.mxu0 0.0
        %1033 = vmatprep.subr.mxu0 0.0
        %1034 = vmatpush1.msra.mxu0 0.0
        %1035 = vmatprep.subr.mxu0 0.0
        %1036 = vmatpush1.msra.mxu0 0.0
        %1037 = vmatprep.subr.mxu0 0.0
        %1038 = vmatpush1.msra.mxu0 0.0
        %1039 = vmatprep.subr.mxu0 0.0
        %1040 = vmatpush1.msra.mxu0 0.0
        %1041 = vmatprep.mubr.f32.mxu0 0.0
        %1042 = vmatmul.mubr.f32.gmra.mrb[0].mxu0 %v941
        %v1043 = vpop.f32.mrb[0].mxu0
        %v1044 = vadd.f32 %v975, %v1043
        %v1045 = vpop.f32.mrb[0].mxu0
        %1046 = vmatprep.mubr.f32.mxu0 0.0
        %1047 = vmatmul.mubr.f32.gmra.mrb[0].mxu0 %v942
        %v1048 = vpop.f32.mrb[0].mxu0
        %v1049 = vadd.f32 %v975, %v1048
        %v1050 = vpop.f32.mrb[0].mxu0
        %1051 = vmatprep.mubr.f32.mxu0 0.0
        %1052 = vmatmul.mubr.f32.gmra.mrb[0].mxu0 %v943
        %v1053 = vpop.f32.mrb[0].mxu0
        %v1054 = vadd.f32 %v975, %v1053
        %v1055 = vpop.f32.mrb[0].mxu0
        %1056 = vmatprep.mubr.f32.mxu0 0.0
        %1057 = vmatmul.mubr.f32.gmra.mrb[0].mxu0 %v944
        %v1058 = vpop.f32.mrb[0].mxu0
        %v1059 = vadd.f32 %v975, %v1058
        %v1060 = vpop.f32.mrb[0].mxu0
        %1061 = vmatprep.mubr.f32.mxu0 0.0
        %1062 = vmatmul.mubr.f32.gmra.mrb[0].mxu0 %v945
        %v1063 = vpop.f32.mrb[0].mxu0
        %v1064 = vadd.f32 %v975, %v1063
        %v1065 = vpop.f32.mrb[0].mxu0
        %1066 = vmatprep.mubr.f32.mxu0 0.0
        %1067 = vmatmul.mubr.f32.gmra.mrb[0].mxu0 %v946
        %v1068 = vpop.f32.mrb[0].mxu0
        %v1069 = vadd.f32 %v975, %v1068
        %v1070 = vpop.f32.mrb[0].mxu0
        %1071 = vmatprep.mubr.f32.mxu0 0.0
        %1072 = vmatmul.mubr.f32.gmra.mrb[0].mxu0 %v947
        %v1073 = vpop.f32.mrb[0].mxu0
        %v1074 = vadd.f32 %v975, %v1073
        %v1075 = vpop.f32.mrb[0].mxu0
        %1076 = vmatprep.mubr.f32.mxu0 0.0
        %1077 = vmatmul.mubr.f32.gmra.mrb[0].mxu0 %v948
        %v1078 = vpop.f32.mrb[0].mxu0
        %v1079 = vadd.f32 %v975, %v1078
        %v1080 = vpop.f32.mrb[0].mxu0
        %1081 = vmatprep.mubr.f32.mxu0 0.0
        %1082 = vmatmul.mubr.f32.gmra.mrb[0].mxu0 %v949
        %v1083 = vpop.f32.mrb[0].mxu0
        %v1084 = vadd.f32 %v975, %v1083
        %v1085 = vpop.f32.mrb[0].mxu0
        %1086 = vmatprep.mubr.f32.mxu0 0.0
        %1087 = vmatmul.mubr.f32.gmra.mrb[0].mxu0 %v950
        %v1088 = vpop.f32.mrb[0].mxu0
        %v1089 = vadd.f32 %v975, %v1088
        %v1090 = vpop.f32.mrb[0].mxu0
        %1091 = vmatprep.mubr.f32.mxu0 0.0
        %1092 = vmatmul.mubr.f32.gmra.mrb[0].mxu0 %v951
        %v1093 = vpop.f32.mrb[0].mxu0
        %v1094 = vadd.f32 %v975, %v1093
        %v1095 = vpop.f32.mrb[0].mxu0
        %1096 = vmatprep.mubr.f32.mxu0 0.0
        %1097 = vmatmul.mubr.f32.gmra.mrb[0].mxu0 %v952
        %v1098 = vpop.f32.mrb[0].mxu0
        %v1099 = vadd.f32 %v975, %v1098
        %v1100 = vpop.f32.mrb[0].mxu0
        %1101 = vmatprep.mubr.f32.mxu0 0.0
        %1102 = vmatmul.mubr.f32.gmra.mrb[0].mxu0 %v953
        %v1103 = vpop.f32.mrb[0].mxu0
        %v1104 = vadd.f32 %v975, %v1103
        %v1105 = vpop.f32.mrb[0].mxu0
        %1106 = vdwg.mxu0
        %vm1107 = vcmp.gt.f32.partialorder %v1044, 0.0
        %vm1108 = vcmp.gt.f32.partialorder %v1049, 0.0
        %vm1109 = vcmp.gt.f32.partialorder %v1054, 0.0
        %vm1110 = vcmp.gt.f32.partialorder %v1059, 0.0
        %vm1111 = vcmp.gt.f32.partialorder %v1064, 0.0
        %vm1112 = vcmp.gt.f32.partialorder %v1069, 0.0
        %vm1113 = vcmp.gt.f32.partialorder %v1074, 0.0
        %vm1114 = vcmp.gt.f32.partialorder %v1079, 0.0
        %vm1115 = vcmp.gt.f32.partialorder %v1084, 0.0
        %vm1116 = vcmp.gt.f32.partialorder %v1089, 0.0
        %vm1117 = vcmp.gt.f32.partialorder %v1094, 0.0
        %vm1118 = vcmp.gt.f32.partialorder %v1099, 0.0
        %vm1119 = vcmp.gt.f32.partialorder %v1104, 0.0
        %v1120 = vmin.f32 %v1044, 0.0
        %v1121 = vmin.f32 %v1049, 0.0
        %v1122 = vmin.f32 %v1054, 0.0
        %v1123 = vmin.f32 %v1059, 0.0
        %v1124 = vmin.f32 %v1064, 0.0
        %v1125 = vmin.f32 %v1069, 0.0
        %v1126 = vmin.f32 %v1074, 0.0
        %v1127 = vmin.f32 %v1079, 0.0
        %v1128 = vmin.f32 %v1084, 0.0
        %v1129 = vmin.f32 %v1089, 0.0
        %v1130 = vmin.f32 %v1094, 0.0
        %v1131 = vmin.f32 %v1099, 0.0
        %v1132 = vmin.f32 %v1104, 0.0
        %v1133 = vmul.f32 %v1120, 1.442695
        %v1134 = vpow.pop %v1133
        %v1135 = vmul.f32 %v1121, 1.442695
        %v1136 = vpow.pop %v1135
        %v1137 = vmul.f32 %v1122, 1.442695
        %v1138 = vpow.pop %v1137
        %v1139 = vmul.f32 %v1123, 1.442695
        %v1140 = vpow.pop %v1139
        %v1141 = vmul.f32 %v1124, 1.442695
        %v1142 = vpow.pop %v1141
        %v1143 = vmul.f32 %v1125, 1.442695
        %v1144 = vpow.pop %v1143
        %v1145 = vmul.f32 %v1126, 1.442695
        %v1146 = vpow.pop %v1145
        %v1147 = vmul.f32 %v1127, 1.442695
        %v1148 = vpow.pop %v1147
        %v1149 = vmul.f32 %v1128, 1.442695
        %v1150 = vpow.pop %v1149
        %v1151 = vmul.f32 %v1129, 1.442695
        %v1152 = vpow.pop %v1151
        %v1153 = vmul.f32 %v1130, 1.442695
        %v1154 = vpow.pop %v1153
        %v1155 = vmul.f32 %v1131, 1.442695
        %v1156 = vpow.pop %v1155
        %v1157 = vmul.f32 %v1132, 1.442695
        %v1158 = vpow.pop %v1157
        %v1159 = vsub.f32 %v1134, 1.0
        %v1160 = vsub.f32 %v1136, 1.0
        %v1161 = vsub.f32 %v1138, 1.0
        %v1162 = vsub.f32 %v1140, 1.0
        %v1163 = vsub.f32 %v1142, 1.0
        %v1164 = vsub.f32 %v1144, 1.0
        %v1165 = vsub.f32 %v1146, 1.0
        %v1166 = vsub.f32 %v1148, 1.0
        %v1167 = vsub.f32 %v1150, 1.0
        %v1168 = vsub.f32 %v1152, 1.0
        %v1169 = vsub.f32 %v1154, 1.0
        %v1170 = vsub.f32 %v1156, 1.0
        %v1171 = vsub.f32 %v1158, 1.0
        %v1172 = vsel %vm1107, %v1044, %v1159
        %v1173 = vsel %vm1108, %v1049, %v1160
        %v1174 = vsel %vm1109, %v1054, %v1161
        %v1175 = vsel %vm1110, %v1059, %v1162
        %v1176 = vsel %vm1111, %v1064, %v1163
        %v1177 = vsel %vm1112, %v1069, %v1164
        %v1178 = vsel %vm1113, %v1074, %v1165
        %v1179 = vsel %vm1114, %v1079, %v1166
        %v1180 = vsel %vm1115, %v1084, %v1167
        %v1181 = vsel %vm1116, %v1089, %v1168
        %v1182 = vsel %vm1117, %v1094, %v1169
        %v1183 = vsel %vm1118, %v1099, %v1170
        %v1184 = vsel %vm1119, %v1104, %v1171
        %v1185 = vld [vmem:[#allocation6] sm:$0xff]
        %v1186 = vld [vmem:[#allocation6 + $0x8] sm:$0xff]
        %v1187 = vld [vmem:[#allocation6 + $0x10] sm:$0xff]
        %v1188 = vld [vmem:[#allocation6 + $0x18] sm:$0xff]
        %v1189 = vld [vmem:[#allocation6 + $0x20] sm:$0xff]
        %v1190 = vld [vmem:[#allocation6 + $0x28] sm:$0xff]
        %v1191 = vld [vmem:[#allocation6 + $0x30] sm:$0xff]
        %v1192 = vld [vmem:[#allocation6 + $0x38] sm:$0xff]
        %v1193 = vld [vmem:[#allocation6 + $0x40] sm:$0xff]
        %v1194 = vld [vmem:[#allocation6 + $0x48] sm:$0xff]
        %v1195 = vld [vmem:[#allocation6 + $0x50] sm:$0xff]
        %v1196 = vld [vmem:[#allocation6 + $0x58] sm:$0xff]
        %v1197 = vld [vmem:[#allocation6 + $0x60] sm:$0xff]
        %v1198 = vld [vmem:[#allocation6 + $0x68] sm:$0xff]
        %v1199 = vld [vmem:[#allocation6 + $0x70] sm:$0xff]
        %v1200 = vld [vmem:[#allocation6 + $0x78] sm:$0xff]
        %v1201 = vld [vmem:[%s9] sm:$0x1]
        %v1203 = vlaneseq
        %v1204 = vshrl.u32 %v1203, 7
        %v1205 = vsub.s32 0, %v1204
        %v1206 = vrot.slane %v1201, %v1205
        %1208 = vmatprep.subr.mxu0 0.0
        %1209 = vmatpush1.msra.mxu0 %v1185
        %1210 = vmatprep.subr.mxu0 0.0
        %1211 = vmatpush1.msra.mxu0 %v1186
        %1212 = vmatprep.subr.mxu0 0.0
        %1213 = vmatpush1.msra.mxu0 %v1187
        %1214 = vmatprep.subr.mxu0 0.0
        %1215 = vmatpush1.msra.mxu0 %v1188
        %1216 = vmatprep.subr.mxu0 0.0
        %1217 = vmatpush1.msra.mxu0 %v1189
        %1218 = vmatprep.subr.mxu0 0.0
        %1219 = vmatpush1.msra.mxu0 %v1190
        %1220 = vmatprep.subr.mxu0 0.0
        %1221 = vmatpush1.msra.mxu0 %v1191
        %1222 = vmatprep.subr.mxu0 0.0
        %1223 = vmatpush1.msra.mxu0 %v1192
        %1224 = vmatprep.subr.mxu0 0.0
        %1225 = vmatpush1.msra.mxu0 %v1193
        %1226 = vmatprep.subr.mxu0 0.0
        %1227 = vmatpush1.msra.mxu0 %v1194
        %1228 = vmatprep.subr.mxu0 0.0
        %1229 = vmatpush1.msra.mxu0 %v1195
        %1230 = vmatprep.subr.mxu0 0.0
        %1231 = vmatpush1.msra.mxu0 %v1196
        %1232 = vmatprep.subr.mxu0 0.0
        %1233 = vmatpush1.msra.mxu0 %v1197
        %1234 = vmatprep.subr.mxu0 0.0
        %1235 = vmatpush1.msra.mxu0 %v1198
        %1236 = vmatprep.subr.mxu0 0.0
        %1237 = vmatpush1.msra.mxu0 %v1199
        %1238 = vmatprep.subr.mxu0 0.0
        %1239 = vmatpush1.msra.mxu0 %v1200
        %1240 = vmatprep.subr.mxu0 0.0
        %1241 = vmatpush1.msra.mxu0 0.0
        %1242 = vmatprep.subr.mxu0 0.0
        %1243 = vmatpush1.msra.mxu0 0.0
        %1244 = vmatprep.subr.mxu0 0.0
        %1245 = vmatpush1.msra.mxu0 0.0
        %1246 = vmatprep.subr.mxu0 0.0
        %1247 = vmatpush1.msra.mxu0 0.0
        %1248 = vmatprep.subr.mxu0 0.0
        %1249 = vmatpush1.msra.mxu0 0.0
        %1250 = vmatprep.subr.mxu0 0.0
        %1251 = vmatpush1.msra.mxu0 0.0
        %1252 = vmatprep.subr.mxu0 0.0
        %1253 = vmatpush1.msra.mxu0 0.0
        %1254 = vmatprep.subr.mxu0 0.0
        %1255 = vmatpush1.msra.mxu0 0.0
        %1256 = vmatprep.subr.mxu0 0.0
        %1257 = vmatpush1.msra.mxu0 0.0
        %1258 = vmatprep.subr.mxu0 0.0
        %1259 = vmatpush1.msra.mxu0 0.0
        %1260 = vmatprep.subr.mxu0 0.0
        %1261 = vmatpush1.msra.mxu0 0.0
        %1262 = vmatprep.subr.mxu0 0.0
        %1263 = vmatpush1.msra.mxu0 0.0
        %1264 = vmatprep.subr.mxu0 0.0
        %1265 = vmatpush1.msra.mxu0 0.0
        %1266 = vmatprep.subr.mxu0 0.0
        %1267 = vmatpush1.msra.mxu0 0.0
        %1268 = vmatprep.subr.mxu0 0.0
        %1269 = vmatpush1.msra.mxu0 0.0
        %1270 = vmatprep.subr.mxu0 0.0
        %1271 = vmatpush1.msra.mxu0 0.0
        %1272 = vmatprep.mubr.f32.mxu0 0.0
        %1273 = vmatmul.mubr.f32.gmra.mrb[0].mxu0 %v1172
        %v1274 = vpop.f32.mrb[0].mxu0
        %v1275 = vadd.f32 %v1206, %v1274
        %v1276 = vpop.f32.mrb[0].mxu0
        %1277 = vmatprep.mubr.f32.mxu0 0.0
        %1278 = vmatmul.mubr.f32.gmra.mrb[0].mxu0 %v1173
        %v1279 = vpop.f32.mrb[0].mxu0
        %v1280 = vadd.f32 %v1206, %v1279
        %v1281 = vpop.f32.mrb[0].mxu0
        %1282 = vmatprep.mubr.f32.mxu0 0.0
        %1283 = vmatmul.mubr.f32.gmra.mrb[0].mxu0 %v1174
        %v1284 = vpop.f32.mrb[0].mxu0
        %v1285 = vadd.f32 %v1206, %v1284
        %v1286 = vpop.f32.mrb[0].mxu0
        %1287 = vmatprep.mubr.f32.mxu0 0.0
        %1288 = vmatmul.mubr.f32.gmra.mrb[0].mxu0 %v1175
        %v1289 = vpop.f32.mrb[0].mxu0
        %v1290 = vadd.f32 %v1206, %v1289
        %v1291 = vpop.f32.mrb[0].mxu0
        %1292 = vmatprep.mubr.f32.mxu0 0.0
        %1293 = vmatmul.mubr.f32.gmra.mrb[0].mxu0 %v1176
        %v1294 = vpop.f32.mrb[0].mxu0
        %v1295 = vadd.f32 %v1206, %v1294
        %v1296 = vpop.f32.mrb[0].mxu0
        %1297 = vmatprep.mubr.f32.mxu0 0.0
        %1298 = vmatmul.mubr.f32.gmra.mrb[0].mxu0 %v1177
        %v1299 = vpop.f32.mrb[0].mxu0
        %v1300 = vadd.f32 %v1206, %v1299
        %v1301 = vpop.f32.mrb[0].mxu0
        %1302 = vmatprep.mubr.f32.mxu0 0.0
        %1303 = vmatmul.mubr.f32.gmra.mrb[0].mxu0 %v1178
        %v1304 = vpop.f32.mrb[0].mxu0
        %v1305 = vadd.f32 %v1206, %v1304
        %v1306 = vpop.f32.mrb[0].mxu0
        %1307 = vmatprep.mubr.f32.mxu0 0.0
        %1308 = vmatmul.mubr.f32.gmra.mrb[0].mxu0 %v1179
        %v1309 = vpop.f32.mrb[0].mxu0
        %v1310 = vadd.f32 %v1206, %v1309
        %v1311 = vpop.f32.mrb[0].mxu0
        %1312 = vmatprep.mubr.f32.mxu0 0.0
        %1313 = vmatmul.mubr.f32.gmra.mrb[0].mxu0 %v1180
        %v1314 = vpop.f32.mrb[0].mxu0
        %v1315 = vadd.f32 %v1206, %v1314
        %v1316 = vpop.f32.mrb[0].mxu0
        %1317 = vmatprep.mubr.f32.mxu0 0.0
        %1318 = vmatmul.mubr.f32.gmra.mrb[0].mxu0 %v1181
        %v1319 = vpop.f32.mrb[0].mxu0
        %v1320 = vadd.f32 %v1206, %v1319
        %v1321 = vpop.f32.mrb[0].mxu0
        %1322 = vmatprep.mubr.f32.mxu0 0.0
        %1323 = vmatmul.mubr.f32.gmra.mrb[0].mxu0 %v1182
        %v1324 = vpop.f32.mrb[0].mxu0
        %v1325 = vadd.f32 %v1206, %v1324
        %v1326 = vpop.f32.mrb[0].mxu0
        %1327 = vmatprep.mubr.f32.mxu0 0.0
        %1328 = vmatmul.mubr.f32.gmra.mrb[0].mxu0 %v1183
        %v1329 = vpop.f32.mrb[0].mxu0
        %v1330 = vadd.f32 %v1206, %v1329
        %v1331 = vpop.f32.mrb[0].mxu0
        %1332 = vmatprep.mubr.f32.mxu0 0.0
        %1333 = vmatmul.mubr.f32.gmra.mrb[0].mxu0 %v1184
        %v1334 = vpop.f32.mrb[0].mxu0
        %v1335 = vadd.f32 %v1206, %v1334
        %v1336 = vpop.f32.mrb[0].mxu0
        %1337 = vdwg.mxu0
        %vm1338 = vcmp.gt.f32.partialorder %v1275, 0.0
        %vm1339 = vcmp.gt.f32.partialorder %v1280, 0.0
        %vm1340 = vcmp.gt.f32.partialorder %v1285, 0.0
        %vm1341 = vcmp.gt.f32.partialorder %v1290, 0.0
        %vm1342 = vcmp.gt.f32.partialorder %v1295, 0.0
        %vm1343 = vcmp.gt.f32.partialorder %v1300, 0.0
        %vm1344 = vcmp.gt.f32.partialorder %v1305, 0.0
        %vm1345 = vcmp.gt.f32.partialorder %v1310, 0.0
        %vm1346 = vcmp.gt.f32.partialorder %v1315, 0.0
        %vm1347 = vcmp.gt.f32.partialorder %v1320, 0.0
        %vm1348 = vcmp.gt.f32.partialorder %v1325, 0.0
        %vm1349 = vcmp.gt.f32.partialorder %v1330, 0.0
        %vm1350 = vcmp.gt.f32.partialorder %v1335, 0.0
        %v1351 = vmin.f32 %v1275, 0.0
        %v1352 = vmin.f32 %v1280, 0.0
        %v1353 = vmin.f32 %v1285, 0.0
        %v1354 = vmin.f32 %v1290, 0.0
        %v1355 = vmin.f32 %v1295, 0.0
        %v1356 = vmin.f32 %v1300, 0.0
        %v1357 = vmin.f32 %v1305, 0.0
        %v1358 = vmin.f32 %v1310, 0.0
        %v1359 = vmin.f32 %v1315, 0.0
        %v1360 = vmin.f32 %v1320, 0.0
        %v1361 = vmin.f32 %v1325, 0.0
        %v1362 = vmin.f32 %v1330, 0.0
        %v1363 = vmin.f32 %v1335, 0.0
        %v1364 = vmul.f32 %v1351, 1.442695
        %v1365 = vpow.pop %v1364
        %v1366 = vmul.f32 %v1352, 1.442695
        %v1367 = vpow.pop %v1366
        %v1368 = vmul.f32 %v1353, 1.442695
        %v1369 = vpow.pop %v1368
        %v1370 = vmul.f32 %v1354, 1.442695
        %v1371 = vpow.pop %v1370
        %v1372 = vmul.f32 %v1355, 1.442695
        %v1373 = vpow.pop %v1372
        %v1374 = vmul.f32 %v1356, 1.442695
        %v1375 = vpow.pop %v1374
        %v1376 = vmul.f32 %v1357, 1.442695
        %v1377 = vpow.pop %v1376
        %v1378 = vmul.f32 %v1358, 1.442695
        %v1379 = vpow.pop %v1378
        %v1380 = vmul.f32 %v1359, 1.442695
        %v1381 = vpow.pop %v1380
        %v1382 = vmul.f32 %v1360, 1.442695
        %v1383 = vpow.pop %v1382
        %v1384 = vmul.f32 %v1361, 1.442695
        %v1385 = vpow.pop %v1384
        %v1386 = vmul.f32 %v1362, 1.442695
        %v1387 = vpow.pop %v1386
        %v1388 = vmul.f32 %v1363, 1.442695
        %v1389 = vpow.pop %v1388
        %v1390 = vsub.f32 %v1365, 1.0
        %v1391 = vsub.f32 %v1367, 1.0
        %v1392 = vsub.f32 %v1369, 1.0
        %v1393 = vsub.f32 %v1371, 1.0
        %v1394 = vsub.f32 %v1373, 1.0
        %v1395 = vsub.f32 %v1375, 1.0
        %v1396 = vsub.f32 %v1377, 1.0
        %v1397 = vsub.f32 %v1379, 1.0
        %v1398 = vsub.f32 %v1381, 1.0
        %v1399 = vsub.f32 %v1383, 1.0
        %v1400 = vsub.f32 %v1385, 1.0
        %v1401 = vsub.f32 %v1387, 1.0
        %v1402 = vsub.f32 %v1389, 1.0
        %v1403 = vsel %vm1338, %v1275, %v1390
        %v1404 = vsel %vm1339, %v1280, %v1391
        %v1405 = vsel %vm1340, %v1285, %v1392
        %v1406 = vsel %vm1341, %v1290, %v1393
        %v1407 = vsel %vm1342, %v1295, %v1394
        %v1408 = vsel %vm1343, %v1300, %v1395
        %v1409 = vsel %vm1344, %v1305, %v1396
        %v1410 = vsel %vm1345, %v1310, %v1397
        %v1411 = vsel %vm1346, %v1315, %v1398
        %v1412 = vsel %vm1347, %v1320, %v1399
        %v1413 = vsel %vm1348, %v1325, %v1400
        %v1414 = vsel %vm1349, %v1330, %v1401
        %v1415 = vsel %vm1350, %v1335, %v1402
        %v1416 = vld [vmem:[#allocation8] sm:$0xff]
        %v1417 = vld [vmem:[#allocation8 + $0x8] sm:$0xff]
        %v1418 = vld [vmem:[#allocation8 + $0x10] sm:$0xff]
        %v1419 = vld [vmem:[#allocation8 + $0x18] sm:$0xff]
        %v1420 = vld [vmem:[#allocation8 + $0x20] sm:$0xff]
        %v1421 = vld [vmem:[#allocation8 + $0x28] sm:$0xff]
        %v1422 = vld [vmem:[#allocation8 + $0x30] sm:$0xff]
        %v1423 = vld [vmem:[#allocation8 + $0x38] sm:$0xff]
        %v1424 = vld [vmem:[#allocation8 + $0x40] sm:$0xff]
        %v1425 = vld [vmem:[#allocation8 + $0x48] sm:$0xff]
        %v1426 = vld [vmem:[#allocation8 + $0x50] sm:$0xff]
        %v1427 = vld [vmem:[#allocation8 + $0x58] sm:$0xff]
        %v1428 = vld [vmem:[#allocation8 + $0x60] sm:$0xff]
        %v1429 = vld [vmem:[#allocation8 + $0x68] sm:$0xff]
        %v1430 = vld [vmem:[#allocation8 + $0x70] sm:$0xff]
        %v1431 = vld [vmem:[#allocation8 + $0x78] sm:$0xff]
        %v1432 = vld [vmem:[#allocation8 + $0x80] sm:$0xff]
        %v1433 = vld [vmem:[#allocation8 + $0x88] sm:$0xff]
        %v1434 = vld [vmem:[#allocation8 + $0x90] sm:$0xff]
        %v1435 = vld [vmem:[#allocation8 + $0x98] sm:$0xff]
        %v1436 = vld [vmem:[#allocation8 + $0xa0] sm:$0xff]
        %v1437 = vld [vmem:[#allocation8 + $0xa8] sm:$0xff]
        %v1438 = vld [vmem:[#allocation8 + $0xb0] sm:$0xff]
        %v1439 = vld [vmem:[#allocation8 + $0xb8] sm:$0xff]
        %v1440 = vld [vmem:[#allocation8 + $0xc0] sm:$0xff]
        %v1441 = vld [vmem:[#allocation8 + $0xc8] sm:$0xff]
        %v1442 = vld [vmem:[#allocation8 + $0xd0] sm:$0xff]
        %v1443 = vld [vmem:[#allocation8 + $0xd8] sm:$0xff]
        %v1444 = vld [vmem:[#allocation8 + $0xe0] sm:$0xff]
        %v1445 = vld [vmem:[#allocation8 + $0xe8] sm:$0xff]
        %v1446 = vld [vmem:[#allocation8 + $0xf0] sm:$0xff]
        %v1447 = vld [vmem:[#allocation8 + $0xf8] sm:$0xff]
        %v1448 = vld [vmem:[#allocation8 + $0x100] sm:$0xff]
        %v1449 = vld [vmem:[#allocation8 + $0x108] sm:$0xff]
        %v1450 = vld [vmem:[#allocation8 + $0x110] sm:$0xff]
        %v1451 = vld [vmem:[#allocation8 + $0x118] sm:$0xff]
        %v1452 = vld [vmem:[#allocation8 + $0x120] sm:$0xff]
        %v1453 = vld [vmem:[#allocation8 + $0x128] sm:$0xff]
        %v1454 = vld [vmem:[#allocation8 + $0x130] sm:$0xff]
        %v1455 = vld [vmem:[#allocation8 + $0x138] sm:$0xff]
        %v1456 = vld [vmem:[#allocation8 + $0x140] sm:$0xff]
        %v1457 = vld [vmem:[#allocation8 + $0x148] sm:$0xff]
        %v1458 = vld [vmem:[#allocation8 + $0x150] sm:$0xff]
        %v1459 = vld [vmem:[#allocation8 + $0x158] sm:$0xff]
        %v1460 = vld [vmem:[#allocation8 + $0x160] sm:$0xff]
        %v1461 = vld [vmem:[#allocation8 + $0x168] sm:$0xff]
        %v1462 = vld [vmem:[#allocation8 + $0x170] sm:$0xff]
        %v1463 = vld [vmem:[#allocation8 + $0x178] sm:$0xff]
        %v1464 = vld [vmem:[%s11] sm:$0x7]
        %v1466 = vlaneseq
        %v1467 = vshrl.u32 %v1466, 7
        %v1468 = vsub.s32 0, %v1467
        %v1469 = vrot.slane %v1464, %v1468
        %v1470 = vlaneseq
        %v1471 = vshrl.u32 %v1470, 7
        %v1472 = vsub.s32 1, %v1471
        %v1473 = vrot.slane %v1464, %v1472
        %v1474 = vlaneseq
        %v1475 = vshrl.u32 %v1474, 7
        %v1476 = vsub.s32 2, %v1475
        %v1477 = vrot.slane %v1464, %v1476
        %1481 = vmatprep.subr.mxu0 %v1417
        %1482 = vmatpush1.msra.mxu0 %v1416
        %1483 = vmatprep.subr.mxu0 %v1420
        %1484 = vmatpush1.msra.mxu0 %v1419
        %1485 = vmatprep.subr.mxu0 %v1423
        %1486 = vmatpush1.msra.mxu0 %v1422
        %1487 = vmatprep.subr.mxu0 %v1426
        %1488 = vmatpush1.msra.mxu0 %v1425
        %1489 = vmatprep.subr.mxu0 %v1429
        %1490 = vmatpush1.msra.mxu0 %v1428
        %1491 = vmatprep.subr.mxu0 %v1432
        %1492 = vmatpush1.msra.mxu0 %v1431
        %1493 = vmatprep.subr.mxu0 %v1435
        %1494 = vmatpush1.msra.mxu0 %v1434
        %1495 = vmatprep.subr.mxu0 %v1438
        %1496 = vmatpush1.msra.mxu0 %v1437
        %1497 = vmatprep.subr.mxu0 %v1441
        %1498 = vmatpush1.msra.mxu0 %v1440
        %1499 = vmatprep.subr.mxu0 %v1444
        %1500 = vmatpush1.msra.mxu0 %v1443
        %1501 = vmatprep.subr.mxu0 %v1447
        %1502 = vmatpush1.msra.mxu0 %v1446
        %1503 = vmatprep.subr.mxu0 %v1450
        %1504 = vmatpush1.msra.mxu0 %v1449
        %1505 = vmatprep.subr.mxu0 %v1453
        %1506 = vmatpush1.msra.mxu0 %v1452
        %1507 = vmatprep.subr.mxu0 %v1456
        %1508 = vmatpush1.msra.mxu0 %v1455
        %1509 = vmatprep.subr.mxu0 %v1459
        %1510 = vmatpush1.msra.mxu0 %v1458
        %1511 = vmatprep.subr.mxu0 %v1462
        %1512 = vmatpush1.msra.mxu0 %v1461
        %1513 = vmatprep.subr.mxu0 0.0
        %1514 = vmatpush1.msra.mxu0 0.0
        %1515 = vmatprep.subr.mxu0 0.0
        %1516 = vmatpush1.msra.mxu0 0.0
        %1517 = vmatprep.subr.mxu0 0.0
        %1518 = vmatpush1.msra.mxu0 0.0
        %1519 = vmatprep.subr.mxu0 0.0
        %1520 = vmatpush1.msra.mxu0 0.0
        %1521 = vmatprep.subr.mxu0 0.0
        %1522 = vmatpush1.msra.mxu0 0.0
        %1523 = vmatprep.subr.mxu0 0.0
        %1524 = vmatpush1.msra.mxu0 0.0
        %1525 = vmatprep.subr.mxu0 0.0
        %1526 = vmatpush1.msra.mxu0 0.0
        %1527 = vmatprep.subr.mxu0 0.0
        %1528 = vmatpush1.msra.mxu0 0.0
        %1529 = vmatprep.subr.mxu0 0.0
        %1530 = vmatpush1.msra.mxu0 0.0
        %1531 = vmatprep.subr.mxu0 0.0
        %1532 = vmatpush1.msra.mxu0 0.0
        %1533 = vmatprep.subr.mxu0 0.0
        %1534 = vmatpush1.msra.mxu0 0.0
        %1535 = vmatprep.subr.mxu0 0.0
        %1536 = vmatpush1.msra.mxu0 0.0
        %1537 = vmatprep.subr.mxu0 0.0
        %1538 = vmatpush1.msra.mxu0 0.0
        %1539 = vmatprep.subr.mxu0 0.0
        %1540 = vmatpush1.msra.mxu0 0.0
        %1541 = vmatprep.subr.mxu0 0.0
        %1542 = vmatpush1.msra.mxu0 0.0
        %1543 = vmatprep.subr.mxu0 0.0
        %1544 = vmatpush1.msra.mxu0 0.0
        %1545 = vmatprep.mubr.f32.mxu0 0.0
        %1546 = vmatmul.mubr.f32.gmra.mrb[0].mxu0 %v1403
        %v1547 = vpop.f32.mrb[0].mxu0
        %v1548 = vadd.f32 %v1469, %v1547
        %v1549 = vpop.f32.mrb[0].mxu0
        %v1550 = vadd.f32 %v1473, %v1549
        %1551 = vmatprep.mubr.f32.mxu0 0.0
        %1552 = vmatmul.mubr.f32.gmra.mrb[0].mxu0 %v1404
        %v1553 = vpop.f32.mrb[0].mxu0
        %v1554 = vadd.f32 %v1469, %v1553
        %v1555 = vpop.f32.mrb[0].mxu0
        %v1556 = vadd.f32 %v1473, %v1555
        %1557 = vmatprep.mubr.f32.mxu0 0.0
        %1558 = vmatmul.mubr.f32.gmra.mrb[0].mxu0 %v1405
        %v1559 = vpop.f32.mrb[0].mxu0
        %v1560 = vadd.f32 %v1469, %v1559
        %v1561 = vpop.f32.mrb[0].mxu0
        %v1562 = vadd.f32 %v1473, %v1561
        %1563 = vmatprep.mubr.f32.mxu0 0.0
        %1564 = vmatmul.mubr.f32.gmra.mrb[0].mxu0 %v1406
        %v1565 = vpop.f32.mrb[0].mxu0
        %v1566 = vadd.f32 %v1469, %v1565
        %v1567 = vpop.f32.mrb[0].mxu0
        %v1568 = vadd.f32 %v1473, %v1567
        %1569 = vmatprep.mubr.f32.mxu0 0.0
        %1570 = vmatmul.mubr.f32.gmra.mrb[0].mxu0 %v1407
        %v1571 = vpop.f32.mrb[0].mxu0
        %v1572 = vadd.f32 %v1469, %v1571
        %v1573 = vpop.f32.mrb[0].mxu0
        %v1574 = vadd.f32 %v1473, %v1573
        %1575 = vmatprep.mubr.f32.mxu0 0.0
        %1576 = vmatmul.mubr.f32.gmra.mrb[0].mxu0 %v1408
        %v1577 = vpop.f32.mrb[0].mxu0
        %v1578 = vadd.f32 %v1469, %v1577
        %v1579 = vpop.f32.mrb[0].mxu0
        %v1580 = vadd.f32 %v1473, %v1579
        %1581 = vmatprep.mubr.f32.mxu0 0.0
        %1582 = vmatmul.mubr.f32.gmra.mrb[0].mxu0 %v1409
        %v1583 = vpop.f32.mrb[0].mxu0
        %v1584 = vadd.f32 %v1469, %v1583
        %v1585 = vpop.f32.mrb[0].mxu0
        %v1586 = vadd.f32 %v1473, %v1585
        %1587 = vmatprep.mubr.f32.mxu0 0.0
        %1588 = vmatmul.mubr.f32.gmra.mrb[0].mxu0 %v1410
        %v1589 = vpop.f32.mrb[0].mxu0
        %v1590 = vadd.f32 %v1469, %v1589
        %v1591 = vpop.f32.mrb[0].mxu0
        %v1592 = vadd.f32 %v1473, %v1591
        %1593 = vmatprep.mubr.f32.mxu0 0.0
        %1594 = vmatmul.mubr.f32.gmra.mrb[0].mxu0 %v1411
        %v1595 = vpop.f32.mrb[0].mxu0
        %v1596 = vadd.f32 %v1469, %v1595
        %v1597 = vpop.f32.mrb[0].mxu0
        %v1598 = vadd.f32 %v1473, %v1597
        %1599 = vmatprep.mubr.f32.mxu0 0.0
        %1600 = vmatmul.mubr.f32.gmra.mrb[0].mxu0 %v1412
        %v1601 = vpop.f32.mrb[0].mxu0
        %v1602 = vadd.f32 %v1469, %v1601
        %v1603 = vpop.f32.mrb[0].mxu0
        %v1604 = vadd.f32 %v1473, %v1603
        %1605 = vmatprep.mubr.f32.mxu0 0.0
        %1606 = vmatmul.mubr.f32.gmra.mrb[0].mxu0 %v1413
        %v1607 = vpop.f32.mrb[0].mxu0
        %v1608 = vadd.f32 %v1469, %v1607
        %v1609 = vpop.f32.mrb[0].mxu0
        %v1610 = vadd.f32 %v1473, %v1609
        %1611 = vmatprep.mubr.f32.mxu0 0.0
        %1612 = vmatmul.mubr.f32.gmra.mrb[0].mxu0 %v1414
        %v1613 = vpop.f32.mrb[0].mxu0
        %v1614 = vadd.f32 %v1469, %v1613
        %v1615 = vpop.f32.mrb[0].mxu0
        %v1616 = vadd.f32 %v1473, %v1615
        %1617 = vmatprep.mubr.f32.mxu0 0.0
        %1618 = vmatmul.mubr.f32.gmra.mrb[0].mxu0 %v1415
        %v1619 = vpop.f32.mrb[0].mxu0
        %v1620 = vadd.f32 %v1469, %v1619
        %v1621 = vpop.f32.mrb[0].mxu0
        %v1622 = vadd.f32 %v1473, %v1621
        %1623 = vdwg.mxu0
        %1624 = vmatprep.subr.mxu0 0.0
        %1625 = vmatpush1.msra.mxu0 %v1418
        %1626 = vmatprep.subr.mxu0 0.0
        %1627 = vmatpush1.msra.mxu0 %v1421
        %1628 = vmatprep.subr.mxu0 0.0
        %1629 = vmatpush1.msra.mxu0 %v1424
        %1630 = vmatprep.subr.mxu0 0.0
        %1631 = vmatpush1.msra.mxu0 %v1427
        %1632 = vmatprep.subr.mxu0 0.0
        %1633 = vmatpush1.msra.mxu0 %v1430
        %1634 = vmatprep.subr.mxu0 0.0
        %1635 = vmatpush1.msra.mxu0 %v1433
        %1636 = vmatprep.subr.mxu0 0.0
        %1637 = vmatpush1.msra.mxu0 %v1436
        %1638 = vmatprep.subr.mxu0 0.0
        %1639 = vmatpush1.msra.mxu0 %v1439
        %1640 = vmatprep.subr.mxu0 0.0
        %1641 = vmatpush1.msra.mxu0 %v1442
        %1642 = vmatprep.subr.mxu0 0.0
        %1643 = vmatpush1.msra.mxu0 %v1445
        %1644 = vmatprep.subr.mxu0 0.0
        %1645 = vmatpush1.msra.mxu0 %v1448
        %1646 = vmatprep.subr.mxu0 0.0
        %1647 = vmatpush1.msra.mxu0 %v1451
        %1648 = vmatprep.subr.mxu0 0.0
        %1649 = vmatpush1.msra.mxu0 %v1454
        %1650 = vmatprep.subr.mxu0 0.0
        %1651 = vmatpush1.msra.mxu0 %v1457
        %1652 = vmatprep.subr.mxu0 0.0
        %1653 = vmatpush1.msra.mxu0 %v1460
        %1654 = vmatprep.subr.mxu0 0.0
        %1655 = vmatpush1.msra.mxu0 %v1463
        %1656 = vmatprep.subr.mxu0 0.0
        %1657 = vmatpush1.msra.mxu0 0.0
        %1658 = vmatprep.subr.mxu0 0.0
        %1659 = vmatpush1.msra.mxu0 0.0
        %1660 = vmatprep.subr.mxu0 0.0
        %1661 = vmatpush1.msra.mxu0 0.0
        %1662 = vmatprep.subr.mxu0 0.0
        %1663 = vmatpush1.msra.mxu0 0.0
        %1664 = vmatprep.subr.mxu0 0.0
        %1665 = vmatpush1.msra.mxu0 0.0
        %1666 = vmatprep.subr.mxu0 0.0
        %1667 = vmatpush1.msra.mxu0 0.0
        %1668 = vmatprep.subr.mxu0 0.0
        %1669 = vmatpush1.msra.mxu0 0.0
        %1670 = vmatprep.subr.mxu0 0.0
        %1671 = vmatpush1.msra.mxu0 0.0
        %1672 = vmatprep.subr.mxu0 0.0
        %1673 = vmatpush1.msra.mxu0 0.0
        %1674 = vmatprep.subr.mxu0 0.0
        %1675 = vmatpush1.msra.mxu0 0.0
        %1676 = vmatprep.subr.mxu0 0.0
        %1677 = vmatpush1.msra.mxu0 0.0
        %1678 = vmatprep.subr.mxu0 0.0
        %1679 = vmatpush1.msra.mxu0 0.0
        %1680 = vmatprep.subr.mxu0 0.0
        %1681 = vmatpush1.msra.mxu0 0.0
        %1682 = vmatprep.subr.mxu0 0.0
        %1683 = vmatpush1.msra.mxu0 0.0
        %1684 = vmatprep.subr.mxu0 0.0
        %1685 = vmatpush1.msra.mxu0 0.0
        %1686 = vmatprep.subr.mxu0 0.0
        %1687 = vmatpush1.msra.mxu0 0.0
        %1688 = vmatprep.mubr.f32.mxu0 0.0
        %1689 = vmatmul.mubr.f32.gmra.mrb[0].mxu0 %v1403
        %v1690 = vpop.f32.mrb[0].mxu0
        %v1691 = vadd.f32 %v1477, %v1690
        %v1692 = vpop.f32.mrb[0].mxu0
        %1693 = vmatprep.mubr.f32.mxu0 0.0
        %1694 = vmatmul.mubr.f32.gmra.mrb[0].mxu0 %v1404
        %v1695 = vpop.f32.mrb[0].mxu0
        %v1696 = vadd.f32 %v1477, %v1695
        %v1697 = vpop.f32.mrb[0].mxu0
        %1698 = vmatprep.mubr.f32.mxu0 0.0
        %1699 = vmatmul.mubr.f32.gmra.mrb[0].mxu0 %v1405
        %v1700 = vpop.f32.mrb[0].mxu0
        %v1701 = vadd.f32 %v1477, %v1700
        %v1702 = vpop.f32.mrb[0].mxu0
        %1703 = vmatprep.mubr.f32.mxu0 0.0
        %1704 = vmatmul.mubr.f32.gmra.mrb[0].mxu0 %v1406
        %v1705 = vpop.f32.mrb[0].mxu0
        %v1706 = vadd.f32 %v1477, %v1705
        %v1707 = vpop.f32.mrb[0].mxu0
        %1708 = vmatprep.mubr.f32.mxu0 0.0
        %1709 = vmatmul.mubr.f32.gmra.mrb[0].mxu0 %v1407
        %v1710 = vpop.f32.mrb[0].mxu0
        %v1711 = vadd.f32 %v1477, %v1710
        %v1712 = vpop.f32.mrb[0].mxu0
        %1713 = vmatprep.mubr.f32.mxu0 0.0
        %1714 = vmatmul.mubr.f32.gmra.mrb[0].mxu0 %v1408
        %v1715 = vpop.f32.mrb[0].mxu0
        %v1716 = vadd.f32 %v1477, %v1715
        %v1717 = vpop.f32.mrb[0].mxu0
        %1718 = vmatprep.mubr.f32.mxu0 0.0
        %1719 = vmatmul.mubr.f32.gmra.mrb[0].mxu0 %v1409
        %v1720 = vpop.f32.mrb[0].mxu0
        %v1721 = vadd.f32 %v1477, %v1720
        %v1722 = vpop.f32.mrb[0].mxu0
        %1723 = vmatprep.mubr.f32.mxu0 0.0
        %1724 = vmatmul.mubr.f32.gmra.mrb[0].mxu0 %v1410
        %v1725 = vpop.f32.mrb[0].mxu0
        %v1726 = vadd.f32 %v1477, %v1725
        %v1727 = vpop.f32.mrb[0].mxu0
        %1728 = vmatprep.mubr.f32.mxu0 0.0
        %1729 = vmatmul.mubr.f32.gmra.mrb[0].mxu0 %v1411
        %v1730 = vpop.f32.mrb[0].mxu0
        %v1731 = vadd.f32 %v1477, %v1730
        %v1732 = vpop.f32.mrb[0].mxu0
        %1733 = vmatprep.mubr.f32.mxu0 0.0
        %1734 = vmatmul.mubr.f32.gmra.mrb[0].mxu0 %v1412
        %v1735 = vpop.f32.mrb[0].mxu0
        %v1736 = vadd.f32 %v1477, %v1735
        %v1737 = vpop.f32.mrb[0].mxu0
        %1738 = vmatprep.mubr.f32.mxu0 0.0
        %1739 = vmatmul.mubr.f32.gmra.mrb[0].mxu0 %v1413
        %v1740 = vpop.f32.mrb[0].mxu0
        %v1741 = vadd.f32 %v1477, %v1740
        %v1742 = vpop.f32.mrb[0].mxu0
        %1743 = vmatprep.mubr.f32.mxu0 0.0
        %1744 = vmatmul.mubr.f32.gmra.mrb[0].mxu0 %v1414
        %v1745 = vpop.f32.mrb[0].mxu0
        %v1746 = vadd.f32 %v1477, %v1745
        %v1747 = vpop.f32.mrb[0].mxu0
        %1748 = vmatprep.mubr.f32.mxu0 0.0
        %1749 = vmatmul.mubr.f32.gmra.mrb[0].mxu0 %v1415
        %v1750 = vpop.f32.mrb[0].mxu0
        %v1751 = vadd.f32 %v1477, %v1750
        %v1752 = vpop.f32.mrb[0].mxu0
        %1753 = vdwg.mxu0
        %1754 = vst [vmem:[%s532] sm:$0xff] %v1548
        %1755 = vst [vmem:[%s532 + $0x8] sm:$0xff] %v1550
        %1756 = vst [vmem:[%s532 + $0x10] sm:$0xff] %v1691
        %1757 = vst [vmem:[%s532 + $0x18] sm:$0xff] %v1554
        %1758 = vst [vmem:[%s532 + $0x20] sm:$0xff] %v1556
        %1759 = vst [vmem:[%s532 + $0x28] sm:$0xff] %v1696
        %1760 = vst [vmem:[%s532 + $0x30] sm:$0xff] %v1560
        %1761 = vst [vmem:[%s532 + $0x38] sm:$0xff] %v1562
        %1762 = vst [vmem:[%s532 + $0x40] sm:$0xff] %v1701
        %1763 = vst [vmem:[%s532 + $0x48] sm:$0xff] %v1566
        %1764 = vst [vmem:[%s532 + $0x50] sm:$0xff] %v1568
        %1765 = vst [vmem:[%s532 + $0x58] sm:$0xff] %v1706
        %1766 = vst [vmem:[%s532 + $0x60] sm:$0xff] %v1572
        %1767 = vst [vmem:[%s532 + $0x68] sm:$0xff] %v1574
        %1768 = vst [vmem:[%s532 + $0x70] sm:$0xff] %v1711
        %1769 = vst [vmem:[%s532 + $0x78] sm:$0xff] %v1578
        %1770 = vst [vmem:[%s532 + $0x80] sm:$0xff] %v1580
        %1771 = vst [vmem:[%s532 + $0x88] sm:$0xff] %v1716
        %1772 = vst [vmem:[%s532 + $0x90] sm:$0xff] %v1584
        %1773 = vst [vmem:[%s532 + $0x98] sm:$0xff] %v1586
        %1774 = vst [vmem:[%s532 + $0xa0] sm:$0xff] %v1721
        %1775 = vst [vmem:[%s532 + $0xa8] sm:$0xff] %v1590
        %1776 = vst [vmem:[%s532 + $0xb0] sm:$0xff] %v1592
        %1777 = vst [vmem:[%s532 + $0xb8] sm:$0xff] %v1726
        %1778 = vst [vmem:[%s532 + $0xc0] sm:$0xff] %v1596
        %1779 = vst [vmem:[%s532 + $0xc8] sm:$0xff] %v1598
        %1780 = vst [vmem:[%s532 + $0xd0] sm:$0xff] %v1731
        %1781 = vst [vmem:[%s532 + $0xd8] sm:$0xff] %v1602
        %1782 = vst [vmem:[%s532 + $0xe0] sm:$0xff] %v1604
        %1783 = vst [vmem:[%s532 + $0xe8] sm:$0xff] %v1736
        %1784 = vst [vmem:[%s532 + $0xf0] sm:$0xff] %v1608
        %1785 = vst [vmem:[%s532 + $0xf8] sm:$0xff] %v1610
        %1786 = vst [vmem:[%s532 + $0x100] sm:$0xff] %v1741
        %1787 = vst [vmem:[%s532 + $0x108] sm:$0xff] %v1614
        %1788 = vst [vmem:[%s532 + $0x110] sm:$0xff] %v1616
        %1789 = vst [vmem:[%s532 + $0x118] sm:$0xff] %v1746
        %1790 = vst [vmem:[%s532 + $0x120] sm:$0xff] %v1620
        %1791 = vst [vmem:[%s532 + $0x128] sm:$0xff] %v1622
        %1792 = vst [vmem:[%s532 + $0x130] sm:$0xff] %v1751
        %s1793 = sand.u32 %s304, 1
        %s1794 = sand.u32 %s304, 1
        %s1795 = smul.addr %s1794, 104
        %s1796 = scalar_lea.vmem [#allocation9], %s1795
        %s1797 = sand.u32 %s330, 1
        %s1798 = scalar_lea.sflag [#allocation5], %s1797
        %s1799 = sand.u32 %s330, 1
        %s1800 = smul.addr %s1799, 312
        %s1801 = scalar_lea.vmem [#allocation10], %s1800
        // Predicated region
        $region81: #{encoder_decoder.1} parent=67 // pred_check
          %p1802 = pneg %p314
        $region82: #{encoder_decoder.1} parent=67 // pred_check_branch
          %1804 = sbr.rel (%p1802) target = $region84
        $region83: #{encoder_decoder.1} parent=67 // pred_region
          %s1805 = smul.u32 13, %s34
          %s1806 = ssub.s32 25, %s1805
          %p1807 = scmp.lt.s32.totalorder %s1806, 13
          %s1808 = scalar_select %p1807, %s1806, 13
          %s1809 = smul.u32 128, %s1808
          %p1810 = scmp.ne.s32.totalorder 0, %s1809
          %s1811 = smul.addr %s1805, 8
          %s1812 = scalar_lea.vmem %s12, %s1811
          // Predicated region
          $region85: #{encoder_decoder.1} parent=83 // pred_check
            %p1813 = pneg %p1810
          $region86: #{encoder_decoder.1} parent=83 // pred_check_branch
            %1815 = sbr.rel (%p1813) target = $region88
          $region87: #{encoder_decoder.1} parent=83 // pred_region
            // Predicated region
            $region89: #{encoder_decoder.1} parent=87 // pred_check
              _
            $region90: #{encoder_decoder.1} parent=87 // pred_check_branch
              %1817 = sbr.rel (0) target = $region92
            $region91: #{encoder_decoder.1} parent=87 // pred_region
              // Predicated region
              $region111: #{encoder_decoder.1} parent=91 // pred_check
                _
              $region112: #{encoder_decoder.1} parent=91 // pred_check_branch
                %1891 = sbr.rel (0) target = $region114
              $region113: #{encoder_decoder.1} parent=91 // pred_region
                %s1892 = sdiv.u32.pop %s1808, 13
                %s1893 = srem.u32.pop %s1808, 13
                // While loop
                $region115: #{encoder_decoder.1} parent=113 // loop_pre_header
                  _
                $region116: #{encoder_decoder.1} parent=113 // loop_header
                  %s1895 = sphi 0, %s1897
                  %p1896 = scmp.ge.s32.totalorder %s1895, %s1892
                  %s1900 = sphi 0, %s1931
                  %s1901 = sphi %s1796, %s1934
                  %s1902 = sphi %s1812, %s1935
                $region117: #{encoder_decoder.1} parent=113 // loop_header_branch
                  %1899 = sbr.rel (%p1896) target = $region121
                $region118: #{encoder_decoder.1} parent=113 // loop_body
                  %v1903 = vld [vmem:[%s1901] sm:$0xff]
                  %1904 = vst [vmem:[%s1902] sm:$0xff] %v1903
                  %v1905 = vld [vmem:[%s1901 + $0x8] sm:$0xff]
                  %1906 = vst [vmem:[%s1902 + $0x8] sm:$0xff] %v1905
                  %v1907 = vld [vmem:[%s1901 + $0x10] sm:$0xff]
                  %1908 = vst [vmem:[%s1902 + $0x10] sm:$0xff] %v1907
                  %v1909 = vld [vmem:[%s1901 + $0x18] sm:$0xff]
                  %1910 = vst [vmem:[%s1902 + $0x18] sm:$0xff] %v1909
                  %v1911 = vld [vmem:[%s1901 + $0x20] sm:$0xff]
                  %1912 = vst [vmem:[%s1902 + $0x20] sm:$0xff] %v1911
                  %v1913 = vld [vmem:[%s1901 + $0x28] sm:$0xff]
                  %1914 = vst [vmem:[%s1902 + $0x28] sm:$0xff] %v1913
                  %v1915 = vld [vmem:[%s1901 + $0x30] sm:$0xff]
                  %1916 = vst [vmem:[%s1902 + $0x30] sm:$0xff] %v1915
                  %v1917 = vld [vmem:[%s1901 + $0x38] sm:$0xff]
                  %1918 = vst [vmem:[%s1902 + $0x38] sm:$0xff] %v1917
                  %v1919 = vld [vmem:[%s1901 + $0x40] sm:$0xff]
                  %1920 = vst [vmem:[%s1902 + $0x40] sm:$0xff] %v1919
                  %v1921 = vld [vmem:[%s1901 + $0x48] sm:$0xff]
                  %1922 = vst [vmem:[%s1902 + $0x48] sm:$0xff] %v1921
                  %v1923 = vld [vmem:[%s1901 + $0x50] sm:$0xff]
                  %1924 = vst [vmem:[%s1902 + $0x50] sm:$0xff] %v1923
                  %v1925 = vld [vmem:[%s1901 + $0x58] sm:$0xff]
                  %1926 = vst [vmem:[%s1902 + $0x58] sm:$0xff] %v1925
                  %v1927 = vld [vmem:[%s1901 + $0x60] sm:$0xff]
                  %1928 = vst [vmem:[%s1902 + $0x60] sm:$0xff] %v1927
                  %s1929 = sadd.s32 1, %s1900
                  %p1930 = scmp.ge.s32.totalorder %s1929, %s1892
                  %s1931 = scalar_select %p1930, 0, %s1929
                  %s1932 = smul.u32 %s1931, 104
                  %s1933 = smul.u32 %s1931, 104
                  %s1934 = scalar_lea.vmem %s1796, %s1932 [#allocation9]
                  %s1935 = scalar_lea.vmem %s1812, %s1933
                $region119: #{encoder_decoder.1} parent=113 // loop_footer
                  %s1897 = sadd.s32 %s1895, 1
                $region120: #{encoder_decoder.1} parent=113 // loop_footer_branch
                  %1894 = sbr.rel target = $region116
                $region121: #{encoder_decoder.1} parent=113 // loop_exit
                  _
                %s1936 = sdiv.u32.pop %s1808, 13
                %s1937 = srem.u32.pop %s1808, 13
                %s1938 = smul.u32 %s1936, 13
                %s1939 = smul.u32 8, %s1938
                %s1940 = scalar_lea.vmem %s1796, %s1939 [#allocation9]
                %s1941 = smul.u32 8, %s1938
                %s1942 = scalar_lea.vmem %s1812, %s1941
                // While loop
                $region122: #{encoder_decoder.1} parent=113 // loop_pre_header
                  _
                $region123: #{encoder_decoder.1} parent=113 // loop_header
                  %s1944 = sphi 0, %s1946
                  %p1945 = scmp.ge.s32.totalorder %s1944, %s1937
                  %s1949 = sphi 0, %s1956
                  %s1950 = sphi %s1940, %s1959
                  %s1951 = sphi %s1942, %s1960
                $region124: #{encoder_decoder.1} parent=113 // loop_header_branch
                  %1948 = sbr.rel (%p1945) target = $region128
                $region125: #{encoder_decoder.1} parent=113 // loop_body
                  %v1952 = vld [vmem:[%s1950] sm:$0xff]
                  %1953 = vst [vmem:[%s1951] sm:$0xff] %v1952
                  %s1954 = sadd.s32 1, %s1949
                  %p1955 = scmp.ge.s32.totalorder %s1954, %s1937
                  %s1956 = scalar_select %p1955, 0, %s1954
                  %s1957 = smul.u32 %s1956, 8
                  %s1958 = smul.u32 %s1956, 8
                  %s1959 = scalar_lea.vmem %s1940, %s1957 [#allocation9]
                  %s1960 = scalar_lea.vmem %s1942, %s1958
                $region126: #{encoder_decoder.1} parent=113 // loop_footer
                  %s1946 = sadd.s32 %s1944, 1
                $region127: #{encoder_decoder.1} parent=113 // loop_footer_branch
                  %1943 = sbr.rel target = $region123
                $region128: #{encoder_decoder.1} parent=113 // loop_exit
                  _
              $region114: #{encoder_decoder.1} parent=91 // pred_fallthru
                _
              // Predicated region
              $region129: #{encoder_decoder.1} parent=91 // pred_check
                _
              $region130: #{encoder_decoder.1} parent=91 // pred_check_branch
                %1962 = sbr.rel target = $region132
              $region131: #{encoder_decoder.1} parent=91 // pred_region
                _
              $region132: #{encoder_decoder.1} parent=91 // pred_fallthru
                _
            $region92: #{encoder_decoder.1} parent=87 // pred_fallthru
              _
            // Predicated region
            $region93: #{encoder_decoder.1} parent=87 // pred_check
              _
            $region94: #{encoder_decoder.1} parent=87 // pred_check_branch
              %1819 = sbr.rel target = $region96
            $region95: #{encoder_decoder.1} parent=87 // pred_region
              %s1821 = sdiv.u32.pop %s1808, 13
              %s1822 = srem.u32.pop %s1808, 13
              // While loop
              $region97: #{encoder_decoder.1} parent=95 // loop_pre_header
                _
              $region98: #{encoder_decoder.1} parent=95 // loop_header
                %s1824 = sphi 0, %s1826
                %p1825 = scmp.ge.s32.totalorder %s1824, %s1821
                %s1829 = sphi 0, %s1860
                %s1830 = sphi %s1796, %s1863
                %s1831 = sphi %s1812, %s1864
              $region99: #{encoder_decoder.1} parent=95 // loop_header_branch
                %1828 = sbr.rel (%p1825) target = $region103
              $region100: #{encoder_decoder.1} parent=95 // loop_body
                %v1832 = vld [vmem:[%s1830] sm:$0xff]
                %1833 = vst [vmem:[%s1831] sm:$0xff] %v1832
                %v1834 = vld [vmem:[%s1830 + $0x8] sm:$0xff]
                %1835 = vst [vmem:[%s1831 + $0x8] sm:$0xff] %v1834
                %v1836 = vld [vmem:[%s1830 + $0x10] sm:$0xff]
                %1837 = vst [vmem:[%s1831 + $0x10] sm:$0xff] %v1836
                %v1838 = vld [vmem:[%s1830 + $0x18] sm:$0xff]
                %1839 = vst [vmem:[%s1831 + $0x18] sm:$0xff] %v1838
                %v1840 = vld [vmem:[%s1830 + $0x20] sm:$0xff]
                %1841 = vst [vmem:[%s1831 + $0x20] sm:$0xff] %v1840
                %v1842 = vld [vmem:[%s1830 + $0x28] sm:$0xff]
                %1843 = vst [vmem:[%s1831 + $0x28] sm:$0xff] %v1842
                %v1844 = vld [vmem:[%s1830 + $0x30] sm:$0xff]
                %1845 = vst [vmem:[%s1831 + $0x30] sm:$0xff] %v1844
                %v1846 = vld [vmem:[%s1830 + $0x38] sm:$0xff]
                %1847 = vst [vmem:[%s1831 + $0x38] sm:$0xff] %v1846
                %v1848 = vld [vmem:[%s1830 + $0x40] sm:$0xff]
                %1849 = vst [vmem:[%s1831 + $0x40] sm:$0xff] %v1848
                %v1850 = vld [vmem:[%s1830 + $0x48] sm:$0xff]
                %1851 = vst [vmem:[%s1831 + $0x48] sm:$0xff] %v1850
                %v1852 = vld [vmem:[%s1830 + $0x50] sm:$0xff]
                %1853 = vst [vmem:[%s1831 + $0x50] sm:$0xff] %v1852
                %v1854 = vld [vmem:[%s1830 + $0x58] sm:$0xff]
                %1855 = vst [vmem:[%s1831 + $0x58] sm:$0xff] %v1854
                %v1856 = vld [vmem:[%s1830 + $0x60] sm:$0xff]
                %1857 = vst [vmem:[%s1831 + $0x60] sm:$0xff] %v1856
                %s1858 = sadd.s32 1, %s1829
                %p1859 = scmp.ge.s32.totalorder %s1858, %s1821
                %s1860 = scalar_select %p1859, 0, %s1858
                %s1861 = smul.u32 %s1860, 104
                %s1862 = smul.u32 %s1860, 104
                %s1863 = scalar_lea.vmem %s1796, %s1861 [#allocation9]
                %s1864 = scalar_lea.vmem %s1812, %s1862
              $region101: #{encoder_decoder.1} parent=95 // loop_footer
                %s1826 = sadd.s32 %s1824, 1
              $region102: #{encoder_decoder.1} parent=95 // loop_footer_branch
                %1823 = sbr.rel target = $region98
              $region103: #{encoder_decoder.1} parent=95 // loop_exit
                _
              %s1865 = sdiv.u32.pop %s1808, 13
              %s1866 = srem.u32.pop %s1808, 13
              %s1867 = smul.u32 %s1865, 13
              %s1868 = smul.u32 8, %s1867
              %s1869 = scalar_lea.vmem %s1796, %s1868 [#allocation9]
              %s1870 = smul.u32 8, %s1867
              %s1871 = scalar_lea.vmem %s1812, %s1870
              // While loop
              $region104: #{encoder_decoder.1} parent=95 // loop_pre_header
                _
              $region105: #{encoder_decoder.1} parent=95 // loop_header
                %s1873 = sphi 0, %s1875
                %p1874 = scmp.ge.s32.totalorder %s1873, %s1866
                %s1878 = sphi 0, %s1885
                %s1879 = sphi %s1869, %s1888
                %s1880 = sphi %s1871, %s1889
              $region106: #{encoder_decoder.1} parent=95 // loop_header_branch
                %1877 = sbr.rel (%p1874) target = $region110
              $region107: #{encoder_decoder.1} parent=95 // loop_body
                %v1881 = vld [vmem:[%s1879] sm:$0xff]
                %1882 = vst [vmem:[%s1880] sm:$0xff] %v1881
                %s1883 = sadd.s32 1, %s1878
                %p1884 = scmp.ge.s32.totalorder %s1883, %s1866
                %s1885 = scalar_select %p1884, 0, %s1883
                %s1886 = smul.u32 %s1885, 8
                %s1887 = smul.u32 %s1885, 8
                %s1888 = scalar_lea.vmem %s1869, %s1886 [#allocation9]
                %s1889 = scalar_lea.vmem %s1871, %s1887
              $region108: #{encoder_decoder.1} parent=95 // loop_footer
                %s1875 = sadd.s32 %s1873, 1
              $region109: #{encoder_decoder.1} parent=95 // loop_footer_branch
                %1872 = sbr.rel target = $region105
              $region110: #{encoder_decoder.1} parent=95 // loop_exit
                _
            $region96: #{encoder_decoder.1} parent=87 // pred_fallthru
              _
          $region88: #{encoder_decoder.1} parent=83 // pred_fallthru
            _
          %1963 = vnop
        $region84: #{encoder_decoder.1} parent=67 // pred_fallthru
          _
        // Predicated region
        $region133: #{encoder_decoder.1} parent=67 // pred_check
          %p1964 = pneg %p340
        $region134: #{encoder_decoder.1} parent=67 // pred_check_branch
          %1966 = sbr.rel (%p1964) target = $region136
        $region135: #{encoder_decoder.1} parent=67 // pred_region
          %s1967 = smul.u32 13, %s34
          %s1968 = ssub.s32 25, %s1967
          %p1969 = scmp.lt.s32.totalorder %s1968, 13
          %s1970 = scalar_select %p1969, %s1968, 13
          %s1971 = smul.u32 128, %s1970
          %s1972 = smul.u32 %s1971, 3
          %s1974 = ssub.s32 4992, %s1972
          %1975 = vsyncadd %s1798, %s1974
          %p1976 = scmp.ne.s32.totalorder 0, %s1972
          %s1977 = smul.addr %s1967, 3
          %s1978 = smul.addr %s1977, 128
          %s1979 = scalar_lea.hbm %s13, %s1978
          %s1980 = smul.u32 24, %s1970
          %s1981 = sshll.u32 %s1801, 4
          %s1982 = int_to_ptr.vmem [resolvable:$true] %s1981
          %s1983 = sshll.u32 %s1980, 4
          %1987 = dma.vmem_to_hbm [thread:$0]  (%p1976), %s1982, %s1983, %s1979, %s1798, 384, 384, 24
        $region136: #{encoder_decoder.1} parent=67 // pred_fallthru
          _
      $region68: #{encoder_decoder.1} parent=5 // pred_fallthru
        _
      %p1988 = scmp.le.s32.totalorder 2, %s29
      // Predicated region
      $region137: #{encoder_decoder.1} parent=5 // pred_check
        %p1989 = pneg %p1988
      $region138: #{encoder_decoder.1} parent=5 // pred_check_branch
        %1991 = sbr.rel (%p1989) target = $region140
      $region139: #{encoder_decoder.1} parent=5 // pred_region
        %s1992 = ssub.s32 %s29, 2
        // Predicated region
        $region141: #{encoder_decoder.1} parent=139 // pred_check
          %p1993 = pneg %p320
        $region142: #{encoder_decoder.1} parent=139 // pred_check_branch
          %1995 = sbr.rel (%p1993) target = $region144
        $region143: #{encoder_decoder.1} parent=139 // pred_region
          %s1996 = sand.u32 %s305, 1
          %s1997 = sand.u32 %s305, 1
          %s1998 = smul.addr %s1997, 104
          %s1999 = scalar_lea.vmem [#allocation9], %s1998
        $region144: #{encoder_decoder.1} parent=139 // pred_fallthru
          _
        // Predicated region
        $region145: #{encoder_decoder.1} parent=139 // pred_check
          %p2000 = pneg %p346
        $region146: #{encoder_decoder.1} parent=139 // pred_check_branch
          %2002 = sbr.rel (%p2000) target = $region148
        $region147: #{encoder_decoder.1} parent=139 // pred_region
          %s2003 = sand.u32 %s331, 1
          %s2004 = scalar_lea.sflag [#allocation5], %s2003
          %s2005 = sand.u32 %s331, 1
          %s2006 = smul.addr %s2005, 312
          %s2007 = scalar_lea.vmem [#allocation10], %s2006
          %2008 = dma.done %s2004, 4992
        $region148: #{encoder_decoder.1} parent=139 // pred_fallthru
          _
      $region140: #{encoder_decoder.1} parent=5 // pred_fallthru
        _
    $region6: #{encoder_decoder.1} parent=1 // loop_footer
      %s33 = sadd.s32 1, %s29
    $region7: #{encoder_decoder.1} parent=1 // loop_footer_branch
      %28 = sbr.rel target = $region3
    $region8: #{encoder_decoder.1} parent=1 // loop_exit
      _
    %2009 = vsyncpa [#allocation4], 1
    %s2010 = scalar_lea.sflag [#allocation4], 1
    %2011 = vsyncpa %s2010, 1
    %2012 = vsyncpa [#allocation7], 1
    %2013 = vsyncpa [#allocation5], 1
    %s2014 = scalar_lea.sflag [#allocation5], 1
    %2015 = vsyncpa %s2014, 1

</llo_original>
